<compile_context>
chip_gen: v7x
topology: tpu7x:2x2x1
jax: 0.10.0
libtpu: 0.0.40
codegen_flags: <defaults>
</compile_context>

<pallas_src>
import functools
import math

import jax
import jax.numpy as jnp
from jax import lax
from jax.experimental import pallas as pl
from jax.experimental.pallas import tpu as pltpu


# ----------------------------- helpers --------------------------------------
def _largest_divisor(n, cap):
    for d in range(min(n, cap), 0, -1):
        if n % d == 0:
            return d
    return 1


def _round_up(x, m):
    return (x + m - 1) // m * m


def _pick_batch_block(b, target=128):
    """Largest multiple-of-8 divisor of b that is <= target (b % 8 == 0)."""
    best = 8
    d = 8
    while d <= min(b, target):
        if b % d == 0:
            best = d
        d += 8
    return best


def _sigmoid(x):
    # sigmoid via the tanh identity: one EUP op instead of exp + reciprocal.
    return 0.5 * jnp.tanh(0.5 * x) + 0.5


# ----------------------------- Pallas kernel --------------------------------
def _sqa_recurrence_kernel(gx_ref, h0_ref, c0_ref, whh_ref,
                           hseq_ref, clast_ref, h_sc, c_sc, *, unroll):
    """Serial LSTM recurrence over one (batch block, time chunk)."""
    t_blk = pl.program_id(1)                 # time-chunk index (serial axis)
    Tc = gx_ref.shape[0]
    H = h_sc.shape[-1]
    cdt = whh_ref.dtype                      # matmul compute dtype

    @pl.when(t_blk == 0)
    def _init():
        # (Re)load the initial state for this batch block.
        h_sc[...] = h0_ref[...].astype(jnp.float32)
        c_sc[...] = c0_ref[...].astype(jnp.float32)

    w_hh = whh_ref[...]                      # hoist the (H, 4H) load out of the loop

    def step(t, carry):
        h, c = carry
        gates = (gx_ref[t].astype(jnp.float32)
                 + jnp.dot(h.astype(cdt), w_hh,
                           preferred_element_type=jnp.float32))
        i_g = gates[:, 0 * H:1 * H]
        f_g = gates[:, 1 * H:2 * H]
        g_g = gates[:, 2 * H:3 * H]
        o_g = gates[:, 3 * H:4 * H]
        c_new = _sigmoid(f_g) * c + _sigmoid(i_g) * jnp.tanh(g_g)
        h_new = _sigmoid(o_g) * jnp.tanh(c_new)
        hseq_ref[t] = h_new.astype(hseq_ref.dtype)
        return h_new, c_new

    h_last, c_last = lax.fori_loop(0, Tc, step, (h_sc[...], c_sc[...]),
                                   unroll=unroll)
    h_sc[...] = h_last
    c_sc[...] = c_last
    # The c_last block is revisited across the (inner) time axis; the write at
    # the final chunk is what gets flushed to HBM when the batch block changes.
    clast_ref[...] = c_last.astype(clast_ref.dtype)


def sqa_lstm_layer(gx, h0, c0, w_hh, *, time_chunk=16, batch_block=None,
                   compute_dtype=jnp.bfloat16):
    """One SQALSTMCell unrolled over time inside a single pallas_call.

    gx: (T, B, 4H) precomputed gate inputs = x@W_ih + q@W_qh + a@W_ah + biases
    h0/c0: (B, H) f32 initial state;  w_hh: (H, 4H)
    """
    T, B, G = gx.shape
    H = h0.shape[-1]
    assert G == 4 * H

    # Pad the batch to a sublane multiple so batch blocks satisfy the (8, 128)
    # tiling constraint; padded rows are dropped after the call.
    Bp = _round_up(max(B, 8), 8)
    if Bp != B:
        gx = jnp.pad(gx, ((0, 0), (0, Bp - B), (0, 0)))
        h0 = jnp.pad(h0, ((0, Bp - B), (0, 0)))
        c0 = jnp.pad(c0, ((0, Bp - B), (0, 0)))

    if batch_block is None:
        # Fill MXU rows (target 128).  When B > target, multiple batch blocks
        # remain so the "parallel" batch axis can shard across v7x's two TCs.
        Bt = _pick_batch_block(Bp, target=128)
    else:
        Bt = batch_block
    assert Bp % Bt == 0 and Bt % 8 == 0, "batch block must be a multiple of 8"

    Tc = _largest_divisor(T, time_chunk)
    # Full unroll for small blocks; throttle at production sizes so fully-live
    # (Bt, 4H) gate tensors don't spill out of the 64-vreg file.
    unroll = 4 if (Bt >= 128 and Tc >= 16) else True

    w_hh_c = w_hh.astype(compute_dtype)
    grid = (Bp // Bt, T // Tc)

    grid_spec = pltpu.PrefetchScalarGridSpec(
        num_scalar_prefetch=0,
        grid=grid,
        in_specs=[
            pl.BlockSpec((Tc, Bt, 4 * H), lambda b, t: (t, b, 0)),   # gate inputs
            pl.BlockSpec((Bt, H), lambda b, t: (b, 0)),              # h0
            pl.BlockSpec((Bt, H), lambda b, t: (b, 0)),              # c0
            pl.BlockSpec((H, 4 * H), lambda b, t: (0, 0)),           # W_hh (const)
        ],
        out_specs=[
            pl.BlockSpec((Tc, Bt, H), lambda b, t: (t, b, 0)),       # h sequence
            pl.BlockSpec((Bt, H), lambda b, t: (b, 0)),              # final c
        ],
        scratch_shapes=[
            pltpu.VMEM((Bt, H), jnp.float32),   # h carry across time chunks
            pltpu.VMEM((Bt, H), jnp.float32),   # c carry across time chunks
        ],
    )

    h_seq, c_last = pl.pallas_call(
        functools.partial(_sqa_recurrence_kernel, unroll=unroll),
        grid_spec=grid_spec,
        out_shape=(
            jax.ShapeDtypeStruct((T, Bp, H), jnp.float32),
            jax.ShapeDtypeStruct((Bp, H), jnp.float32),
        ),
        compiler_params=pltpu.CompilerParams(
            dimension_semantics=("parallel", "arbitrary"),  # batch ||, time serial
            vmem_limit_bytes=64 * 1024 * 1024,
        ),
    )(gx, h0, c0, w_hh_c)

    if Bp != B:
        h_seq = h_seq[:, :B]
        c_last = c_last[:B]
    return h_seq, c_last


# --------------------------- parameters & wrapper ---------------------------
def init_sqa_lstm_params(key, question_size, answer_size, input_size,
                         hidden_size, num_layers):
    """Deterministic init matching SQALSTMCell.init_parameters (U(-1/sqrt(H), 1/sqrt(H)))."""
    stdv = 1.0 / math.sqrt(hidden_size)
    params = []
    in_sz = input_size
    for _ in range(num_layers):
        keys = jax.random.split(key, 9)
        key = keys[0]
        u = lambda k, shape: jax.random.uniform(k, shape, jnp.float32, -stdv, stdv)
        params.append(dict(
            w_qh=u(keys[1], (question_size, 4 * hidden_size)),
            w_ah=u(keys[2], (answer_size, 4 * hidden_size)),
            w_ih=u(keys[3], (in_sz, 4 * hidden_size)),
            w_hh=u(keys[4], (hidden_size, 4 * hidden_size)),
            b_qh=u(keys[5], (4 * hidden_size,)),
            b_ah=u(keys[6], (4 * hidden_size,)),
            b_ih=u(keys[7], (4 * hidden_size,)),
            b_hh=u(keys[8], (4 * hidden_size,)),
        ))
        in_sz = hidden_size
    return params


def _qa_precompute(q0, a0, p, is_peephole, precision=None):
    """Constant (over time) q/a + bias gate contribution (plain XLA).
    Note: like the torch module, `is_peephole` only zeroes the q/a contribution
    to the cell-gate slice — there are no cell-state peephole terms in the spec."""
    H = p["w_hh"].shape[0]
    q_t = jnp.dot(q0, p["w_qh"], precision=precision) + p["b_qh"]
    a_t = jnp.dot(a0, p["w_ah"], precision=precision) + p["b_ah"]
    if is_peephole:
        q_t = q_t.at[:, 2 * H:3 * H].set(0.0)
        a_t = a_t.at[:, 2 * H:3 * H].set(0.0)
    return q_t + a_t + p["b_ih"] + p["b_hh"]


def _gate_input_precompute(x_seq, qa, w_ih, compute_dtype, gate_dtype,
                           precision=None):
    """Non-recurrent input projection for ALL timesteps as one XLA matmul."""
    T, B, I = x_seq.shape
    gx = jnp.dot(x_seq.reshape(T * B, I).astype(compute_dtype),
                 w_ih.astype(compute_dtype),
                 preferred_element_type=jnp.float32, precision=precision)
    gx = gx.reshape(T, B, -1) + qa[None]
    return gx.astype(gate_dtype)


def sqa_lstm_forward(question, answer, x, init_states, params,
                     is_peephole=False, time_chunk=16, batch_block=None,
                     compute_dtype=jnp.bfloat16, gate_input_dtype=None):
    """Mirrors SQALSTM.forward with batch_first=False.

    question: (Sq, B, Qsz)  answer: (Sa, B, Asz)  (only index 0 used, like torch)
    x: (T, B, I)   init_states: (h0, c0), each (num_layers, B, H)
    returns (out, (h_n, c_n)) with out (T, B, H), h_n/c_n (num_layers, B, H)
    """
    q0, a0 = question[0], answer[0]
    h0_all, c0_all = init_states
    gate_dtype = compute_dtype if gate_input_dtype is None else gate_input_dtype
    prec = lax.Precision.HIGHEST if compute_dtype == jnp.float32 else None
    inputs = x
    h_finals, c_finals = [], []
    h_seq = None
    for i, p in enumerate(params):
        qa = _qa_precompute(q0, a0, p, is_peephole, precision=prec)
        gx = _gate_input_precompute(inputs, qa, p["w_ih"], compute_dtype,
                                    gate_dtype, precision=prec)
        h_seq, c_last = sqa_lstm_layer(gx, h0_all[i], c0_all[i], p["w_hh"],
                                       time_chunk=time_chunk,
                                       batch_block=batch_block,
                                       compute_dtype=compute_dtype)
        inputs = h_seq
        h_finals.append(h_seq[-1])
        c_finals.append(c_last)
    return h_seq, (jnp.stack(h_finals), jnp.stack(c_finals))


# ------------------------------ references ----------------------------------
def _torch_reference(question, answer, x, init_states, params, is_peephole=False):
    """Literal, non-hoisted transcription of SQALSTMCell/SQALSTM.forward in f32
    with highest-precision matmuls (non-circular check)."""
    high = lax.Precision.HIGHEST
    q0, a0 = question[0], answer[0]
    h0_all, c0_all = init_states
    inputs = x
    h_finals, c_finals = [], []
    h_seq = None
    for i, p in enumerate(params):
        H = p["w_hh"].shape[0]
        h_t, c_t = h0_all[i], c0_all[i]
        hs = []
        for t in range(x.shape[0]):
            q_temp = jnp.dot(q0, p["w_qh"], precision=high) + p["b_qh"]
            a_temp = jnp.dot(a0, p["w_ah"], precision=high) + p["b_ah"]
            if is_peephole:
                q_temp = q_temp.at[:, 2 * H:3 * H].set(0.0)
                a_temp = a_temp.at[:, 2 * H:3 * H].set(0.0)
            gates = (q_temp + a_temp
                     + jnp.dot(inputs[t], p["w_ih"], precision=high) + p["b_ih"]
                     + jnp.dot(h_t, p["w_hh"], precision=high) + p["b_hh"])
            i_g, f_g, g_g, o_g = jnp.split(gates, 4, axis=1)
            c_t = jax.nn.sigmoid(f_g) * c_t + jax.nn.sigmoid(i_g) * jnp.tanh(g_g)
            h_t = jax.nn.sigmoid(o_g) * jnp.tanh(c_t)
            hs.append(h_t)
        h_seq = jnp.stack(hs)
        inputs = h_seq
        h_finals.append(h_t)
        c_finals.append(c_t)
    return h_seq, (jnp.stack(h_finals), jnp.stack(c_finals))


def _matched_reference(question, answer, x, init_states, params,
                       is_peephole=False, compute_dtype=jnp.bfloat16,
                       gate_input_dtype=None):
    """Same hoisting / dtype casts as the kernel path but the recurrence runs in
    plain XLA.  Validates the kernel's chunking & state carry at matched precision."""
    q0, a0 = question[0], answer[0]
    h0_all, c0_all = init_states
    gate_dtype = compute_dtype if gate_input_dtype is None else gate_input_dtype
    prec = lax.Precision.HIGHEST if compute_dtype == jnp.float32 else None
    inputs = x
    h_finals, c_finals = [], []
    h_seq = None
    for i, p in enumerate(params):
        qa = _qa_precompute(q0, a0, p, is_peephole, precision=prec)
        gx = _gate_input_precompute(inputs, qa, p["w_ih"], compute_dtype,
                                    gate_dtype, precision=prec)
        w_hh = p["w_hh"].astype(compute_dtype)
        h_t, c_t = h0_all[i], c0_all[i]
        hs = []
        for t in range(x.shape[0]):
            gates = (gx[t].astype(jnp.float32)
                     + jnp.dot(h_t.astype(compute_dtype), w_hh,
                               preferred_element_type=jnp.float32))
            i_g, f_g, g_g, o_g = jnp.split(gates, 4, axis=1)
            c_t = _sigmoid(f_g) * c_t + _sigmoid(i_g) * jnp.tanh(g_g)
            h_t = _sigmoid(o_g) * jnp.tanh(c_t)
            hs.append(h_t)
        h_seq = jnp.stack(hs)
        inputs = h_seq
        h_finals.append(h_t)
        c_finals.append(c_t)
    return h_seq, (jnp.stack(h_finals), jnp.stack(c_finals))


# --------------------------------- demo -------------------------------------
if __name__ == "__main__":
    # H = 128 -> gate slices are vreg-aligned and h_seq stores are lane-dense.
    QSZ, ASZ, ISZ, HSZ = 16, 16, 16, 128
    T, B, NUM_LAYERS = 16, 16, 2

    key = jax.random.PRNGKey(0)
    kp, kq, ka, kx, kh, kc = jax.random.split(key, 6)
    params = init_sqa_lstm_params(kp, QSZ, ASZ, ISZ, HSZ, NUM_LAYERS)

    question = jax.random.normal(kq, (1, B, QSZ), jnp.float32)
    answer = jax.random.normal(ka, (1, B, ASZ), jnp.float32)
    x = jax.random.normal(kx, (T, B, ISZ), jnp.float32)
    h0 = jax.random.normal(kh, (NUM_LAYERS, B, HSZ), jnp.float32) * 0.1
    c0 = jax.random.normal(kc, (NUM_LAYERS, B, HSZ), jnp.float32) * 0.1

    # 1) Non-circular check: f32-compute kernel vs literal torch-f32 math.
    #    batch_block=8 / time_chunk=8 -> 2x2 grid: exercises multi-block batch
    #    sharding and the cross-chunk h/c carry.
    fwd_f32 = jax.jit(functools.partial(
        sqa_lstm_forward, compute_dtype=jnp.float32,
        batch_block=8, time_chunk=8))
    out32, (h32, c32) = fwd_f32(question, answer, x, (h0, c0), params)
    jax.block_until_ready((out32, h32, c32))

    ref_out, (ref_h, ref_c) = jax.jit(_torch_reference)(
        question, answer, x, (h0, c0), params)
    assert out32.shape == (T, B, HSZ)
    assert h32.shape == (NUM_LAYERS, B, HSZ) and c32.shape == (NUM_LAYERS, B, HSZ)
    # Tolerance covers MXU-vs-XLA f32 matmul pass differences accumulated over
    # the 16-step x 2-layer recurrence; structural bugs produce O(1) errors.
    assert jnp.allclose(out32, ref_out, atol=3e-2, rtol=3e-2), \
        float(jnp.max(jnp.abs(out32 - ref_out)))
    assert jnp.allclose(h32, ref_h, atol=3e-2, rtol=3e-2)
    assert jnp.allclose(c32, ref_c, atol=3e-2, rtol=3e-2)

    # 2) Default fast path (bf16 MXU matmuls, bf16-streamed gate inputs, full
    #    batch block, single time chunk) vs a precision-matched XLA reference.
    fwd_fast = jax.jit(sqa_lstm_forward)
    out, (h_n, c_n) = fwd_fast(question, answer, x, (h0, c0), params)
    jax.block_until_ready((out, h_n, c_n))

    m_out, (m_h, m_c) = jax.jit(_matched_reference)(
        question, answer, x, (h0, c0), params)
    assert jnp.allclose(out, m_out, atol=2e-3, rtol=2e-3), \
        float(jnp.max(jnp.abs(out - m_out)))
    assert jnp.allclose(h_n, m_h, atol=2e-3, rtol=2e-3)
    assert jnp.allclose(c_n, m_c, atol=2e-3, rtol=2e-3)

    print("KERNEL_OK")
</pallas_src>

<mosaic_0001>
module attributes {stable_mosaic.version = 11 : i64} {
  func.func @_sqa_recurrence_kernel(%arg0: i32, %arg1: i32, %arg2: memref<8x8x512xf32, #tpu.memory_space<vmem>>, %arg3: memref<8x128xf32, #tpu.memory_space<vmem>>, %arg4: memref<8x128xf32, #tpu.memory_space<vmem>>, %arg5: memref<128x512xf32, #tpu.memory_space<vmem>>, %arg6: memref<8x8x128xf32, #tpu.memory_space<vmem>>, %arg7: memref<8x128xf32, #tpu.memory_space<vmem>>, %arg8: memref<8x128xf32, #tpu.memory_space<vmem>>, %arg9: memref<8x128xf32, #tpu.memory_space<vmem>>) attributes {dimension_semantics = [#tpu.dimension_semantics<parallel>, #tpu.dimension_semantics<arbitrary>], iteration_bounds = array<i64: 2, 2>, scalar_prefetch = 0 : i64, scratch_operands = 2 : i64, tpu.core_type = #tpu.core_type<tc>, window_params = [{transform_indices = @transform_0, window_bounds = array<i64: 8, 8, 512>}, {transform_indices = @transform_1, window_bounds = array<i64: 8, 128>}, {transform_indices = @transform_2, window_bounds = array<i64: 8, 128>}, {pipeline_mode = #tpu.pipeline_mode<synchronous>, transform_indices = @transform_3, window_bounds = array<i64: 128, 512>}, {transform_indices = @transform_4, window_bounds = array<i64: 8, 8, 128>}, {transform_indices = @transform_5, window_bounds = array<i64: 8, 128>}]} {
    %c0_i32 = arith.constant 0 : i32
    %0 = arith.cmpi eq, %arg1, %c0_i32 : i32
    %1 = arith.extui %0 : i1 to i32
    %c0_i32_0 = arith.constant 0 : i32
    %2 = arith.cmpi ne, %1, %c0_i32_0 : i32
    scf.if %2 {
      %c0_124 = arith.constant 0 : index
      %c0_125 = arith.constant 0 : index
      %329 = vector.load %arg3[%c0_124, %c0_125] : memref<8x128xf32, #tpu.memory_space<vmem>>, vector<8x128xf32>
      %c0_126 = arith.constant 0 : index
      %c0_127 = arith.constant 0 : index
      %330 = vector.load %arg8[%c0_126, %c0_127] : memref<8x128xf32, #tpu.memory_space<vmem>>, vector<8x128xf32>
      tpu.vector_store %arg8[%c0_126, %c0_127], %329 {strides = array<i32>} : memref<8x128xf32, #tpu.memory_space<vmem>>, vector<8x128xf32>,
      %c0_128 = arith.constant 0 : index
      %c0_129 = arith.constant 0 : index
      %331 = vector.load %arg4[%c0_128, %c0_129] : memref<8x128xf32, #tpu.memory_space<vmem>>, vector<8x128xf32>
      %c0_130 = arith.constant 0 : index
      %c0_131 = arith.constant 0 : index
      %332 = vector.load %arg9[%c0_130, %c0_131] : memref<8x128xf32, #tpu.memory_space<vmem>>, vector<8x128xf32>
      tpu.vector_store %arg9[%c0_130, %c0_131], %331 {strides = array<i32>} : memref<8x128xf32, #tpu.memory_space<vmem>>, vector<8x128xf32>,
    } else {
    }
    %c0 = arith.constant 0 : index
    %c0_1 = arith.constant 0 : index
    %3 = vector.load %arg5[%c0, %c0_1] : memref<128x512xf32, #tpu.memory_space<vmem>>, vector<128x512xf32>
    %c0_2 = arith.constant 0 : index
    %c0_3 = arith.constant 0 : index
    %4 = vector.load %arg8[%c0_2, %c0_3] : memref<8x128xf32, #tpu.memory_space<vmem>>, vector<8x128xf32>
    %c0_4 = arith.constant 0 : index
    %c0_5 = arith.constant 0 : index
    %5 = vector.load %arg9[%c0_4, %c0_5] : memref<8x128xf32, #tpu.memory_space<vmem>>, vector<8x128xf32>
    %c0_i32_6 = arith.constant 0 : i32
    %6 = arith.index_cast %c0_i32_6 : i32 to index
    %c0_7 = arith.constant 0 : index
    %c0_8 = arith.constant 0 : index
    %7 = vector.load %arg2[%6, %c0_7, %c0_8] : memref<8x8x512xf32, #tpu.memory_space<vmem>>, vector<1x8x512xf32>
    %8 = vector.shape_cast %7 : vector<1x8x512xf32> to vector<8x512xf32>
    %cst = arith.constant dense<0.000000e+00> : vector<8x512xf32>
    %9 = tpu.matmul %4, %3, %cst {dimension_numbers = #tpu.dot_dimension_numbers<[1], [0], [0], [1], [0, 0, 1, 1], [], []>} : vector<8x128xf32>, vector<128x512xf32>, vector<8x512xf32> -> vector<8x512xf32>
    %10 = arith.addf %8, %9 : vector<8x512xf32>
    %11 = vector.extract_strided_slice %10 {offsets = [0, 0], sizes = [8, 128], strides = [1, 1]} : vector<8x512xf32> to vector<8x128xf32>
    %12 = vector.extract_strided_slice %10 {offsets = [0, 128], sizes = [8, 128], strides = [1, 1]} : vector<8x512xf32> to vector<8x128xf32>
    %13 = vector.extract_strided_slice %10 {offsets = [0, 256], sizes = [8, 128], strides = [1, 1]} : vector<8x512xf32> to vector<8x128xf32>
    %14 = vector.extract_strided_slice %10 {offsets = [0, 384], sizes = [8, 128], strides = [1, 1]} : vector<8x512xf32> to vector<8x128xf32>
    %cst_9 = arith.constant 5.000000e-01 : f32
    %15 = vector.broadcast %cst_9 : f32 to vector<8x128xf32>
    %16 = arith.mulf %15, %12 : vector<8x128xf32>
    %17 = math.tanh %16 : vector<8x128xf32>
    %cst_10 = arith.constant 5.000000e-01 : f32
    %18 = vector.broadcast %cst_10 : f32 to vector<8x128xf32>
    %19 = arith.mulf %18, %17 : vector<8x128xf32>
    %cst_11 = arith.constant 5.000000e-01 : f32
    %20 = vector.broadcast %cst_11 : f32 to vector<8x128xf32>
    %21 = arith.addf %19, %20 : vector<8x128xf32>
    %22 = arith.mulf %21, %5 : vector<8x128xf32>
    %cst_12 = arith.constant 5.000000e-01 : f32
    %23 = vector.broadcast %cst_12 : f32 to vector<8x128xf32>
    %24 = arith.mulf %23, %11 : vector<8x128xf32>
    %25 = math.tanh %24 : vector<8x128xf32>
    %cst_13 = arith.constant 5.000000e-01 : f32
    %26 = vector.broadcast %cst_13 : f32 to vector<8x128xf32>
    %27 = arith.mulf %26, %25 : vector<8x128xf32>
    %cst_14 = arith.constant 5.000000e-01 : f32
    %28 = vector.broadcast %cst_14 : f32 to vector<8x128xf32>
    %29 = arith.addf %27, %28 : vector<8x128xf32>
    %30 = math.tanh %13 : vector<8x128xf32>
    %31 = arith.mulf %29, %30 : vector<8x128xf32>
    %32 = arith.addf %22, %31 : vector<8x128xf32>
    %cst_15 = arith.constant 5.000000e-01 : f32
    %33 = vector.broadcast %cst_15 : f32 to vector<8x128xf32>
    %34 = arith.mulf %33, %14 : vector<8x128xf32>
    %35 = math.tanh %34 : vector<8x128xf32>
    %cst_16 = arith.constant 5.000000e-01 : f32
    %36 = vector.broadcast %cst_16 : f32 to vector<8x128xf32>
    %37 = arith.mulf %36, %35 : vector<8x128xf32>
    %cst_17 = arith.constant 5.000000e-01 : f32
    %38 = vector.broadcast %cst_17 : f32 to vector<8x128xf32>
    %39 = arith.addf %37, %38 : vector<8x128xf32>
    %40 = math.tanh %32 : vector<8x128xf32>
    %41 = arith.mulf %39, %40 : vector<8x128xf32>
    %42 = arith.index_cast %c0_i32_6 : i32 to index
    %c0_18 = arith.constant 0 : index
    %c0_19 = arith.constant 0 : index
    %43 = vector.load %arg6[%42, %c0_18, %c0_19] : memref<8x8x128xf32, #tpu.memory_space<vmem>>, vector<1x8x128xf32>
    %44 = vector.shape_cast %43 : vector<1x8x128xf32> to vector<8x128xf32>
    %45 = vector.shape_cast %41 : vector<8x128xf32> to vector<1x8x128xf32>
    tpu.vector_store %arg6[%42, %c0_18, %c0_19], %45 {strides = array<i32>} : memref<8x8x128xf32, #tpu.memory_space<vmem>>, vector<1x8x128xf32>,
    %c1_i32 = arith.constant 1 : i32
    %46 = arith.index_cast %c1_i32 : i32 to index
    %c0_20 = arith.constant 0 : index
    %c0_21 = arith.constant 0 : index
    %47 = vector.load %arg2[%46, %c0_20, %c0_21] : memref<8x8x512xf32, #tpu.memory_space<vmem>>, vector<1x8x512xf32>
    %48 = vector.shape_cast %47 : vector<1x8x512xf32> to vector<8x512xf32>
    %cst_22 = arith.constant dense<0.000000e+00> : vector<8x512xf32>
    %49 = tpu.matmul %41, %3, %cst_22 {dimension_numbers = #tpu.dot_dimension_numbers<[1], [0], [0], [1], [0, 0, 1, 1], [], []>} : vector<8x128xf32>, vector<128x512xf32>, vector<8x512xf32> -> vector<8x512xf32>
    %50 = arith.addf %48, %49 : vector<8x512xf32>
    %51 = vector.extract_strided_slice %50 {offsets = [0, 0], sizes = [8, 128], strides = [1, 1]} : vector<8x512xf32> to vector<8x128xf32>
    %52 = vector.extract_strided_slice %50 {offsets = [0, 128], sizes = [8, 128], strides = [1, 1]} : vector<8x512xf32> to vector<8x128xf32>
    %53 = vector.extract_strided_slice %50 {offsets = [0, 256], sizes = [8, 128], strides = [1, 1]} : vector<8x512xf32> to vector<8x128xf32>
    %54 = vector.extract_strided_slice %50 {offsets = [0, 384], sizes = [8, 128], strides = [1, 1]} : vector<8x512xf32> to vector<8x128xf32>
    %cst_23 = arith.constant 5.000000e-01 : f32
    %55 = vector.broadcast %cst_23 : f32 to vector<8x128xf32>
    %56 = arith.mulf %55, %52 : vector<8x128xf32>
    %57 = math.tanh %56 : vector<8x128xf32>
    %cst_24 = arith.constant 5.000000e-01 : f32
    %58 = vector.broadcast %cst_24 : f32 to vector<8x128xf32>
    %59 = arith.mulf %58, %57 : vector<8x128xf32>
    %cst_25 = arith.constant 5.000000e-01 : f32
    %60 = vector.broadcast %cst_25 : f32 to vector<8x128xf32>
    %61 = arith.addf %59, %60 : vector<8x128xf32>
    %62 = arith.mulf %61, %32 : vector<8x128xf32>
    %cst_26 = arith.constant 5.000000e-01 : f32
    %63 = vector.broadcast %cst_26 : f32 to vector<8x128xf32>
    %64 = arith.mulf %63, %51 : vector<8x128xf32>
    %65 = math.tanh %64 : vector<8x128xf32>
    %cst_27 = arith.constant 5.000000e-01 : f32
    %66 = vector.broadcast %cst_27 : f32 to vector<8x128xf32>
    %67 = arith.mulf %66, %65 : vector<8x128xf32>
    %cst_28 = arith.constant 5.000000e-01 : f32
    %68 = vector.broadcast %cst_28 : f32 to vector<8x128xf32>
    %69 = arith.addf %67, %68 : vector<8x128xf32>
    %70 = math.tanh %53 : vector<8x128xf32>
    %71 = arith.mulf %69, %70 : vector<8x128xf32>
    %72 = arith.addf %62, %71 : vector<8x128xf32>
    %cst_29 = arith.constant 5.000000e-01 : f32
    %73 = vector.broadcast %cst_29 : f32 to vector<8x128xf32>
    %74 = arith.mulf %73, %54 : vector<8x128xf32>
    %75 = math.tanh %74 : vector<8x128xf32>
    %cst_30 = arith.constant 5.000000e-01 : f32
    %76 = vector.broadcast %cst_30 : f32 to vector<8x128xf32>
    %77 = arith.mulf %76, %75 : vector<8x128xf32>
    %cst_31 = arith.constant 5.000000e-01 : f32
    %78 = vector.broadcast %cst_31 : f32 to vector<8x128xf32>
    %79 = arith.addf %77, %78 : vector<8x128xf32>
    %80 = math.tanh %72 : vector<8x128xf32>
    %81 = arith.mulf %79, %80 : vector<8x128xf32>
    %82 = arith.index_cast %c1_i32 : i32 to index
    %c0_32 = arith.constant 0 : index
    %c0_33 = arith.constant 0 : index
    %83 = vector.load %arg6[%82, %c0_32, %c0_33] : memref<8x8x128xf32, #tpu.memory_space<vmem>>, vector<1x8x128xf32>
    %84 = vector.shape_cast %83 : vector<1x8x128xf32> to vector<8x128xf32>
    %85 = vector.shape_cast %81 : vector<8x128xf32> to vector<1x8x128xf32>
    tpu.vector_store %arg6[%82, %c0_32, %c0_33], %85 {strides = array<i32>} : memref<8x8x128xf32, #tpu.memory_space<vmem>>, vector<1x8x128xf32>,
    %c2_i32 = arith.constant 2 : i32
    %86 = arith.index_cast %c2_i32 : i32 to index
    %c0_34 = arith.constant 0 : index
    %c0_35 = arith.constant 0 : index
    %87 = vector.load %arg2[%86, %c0_34, %c0_35] : memref<8x8x512xf32, #tpu.memory_space<vmem>>, vector<1x8x512xf32>
    %88 = vector.shape_cast %87 : vector<1x8x512xf32> to vector<8x512xf32>
    %cst_36 = arith.constant dense<0.000000e+00> : vector<8x512xf32>
    %89 = tpu.matmul %81, %3, %cst_36 {dimension_numbers = #tpu.dot_dimension_numbers<[1], [0], [0], [1], [0, 0, 1, 1], [], []>} : vector<8x128xf32>, vector<128x512xf32>, vector<8x512xf32> -> vector<8x512xf32>
    %90 = arith.addf %88, %89 : vector<8x512xf32>
    %91 = vector.extract_strided_slice %90 {offsets = [0, 0], sizes = [8, 128], strides = [1, 1]} : vector<8x512xf32> to vector<8x128xf32>
    %92 = vector.extract_strided_slice %90 {offsets = [0, 128], sizes = [8, 128], strides = [1, 1]} : vector<8x512xf32> to vector<8x128xf32>
    %93 = vector.extract_strided_slice %90 {offsets = [0, 256], sizes = [8, 128], strides = [1, 1]} : vector<8x512xf32> to vector<8x128xf32>
    %94 = vector.extract_strided_slice %90 {offsets = [0, 384], sizes = [8, 128], strides = [1, 1]} : vector<8x512xf32> to vector<8x128xf32>
    %cst_37 = arith.constant 5.000000e-01 : f32
    %95 = vector.broadcast %cst_37 : f32 to vector<8x128xf32>
    %96 = arith.mulf %95, %92 : vector<8x128xf32>
    %97 = math.tanh %96 : vector<8x128xf32>
    %cst_38 = arith.constant 5.000000e-01 : f32
    %98 = vector.broadcast %cst_38 : f32 to vector<8x128xf32>
    %99 = arith.mulf %98, %97 : vector<8x128xf32>
    %cst_39 = arith.constant 5.000000e-01 : f32
    %100 = vector.broadcast %cst_39 : f32 to vector<8x128xf32>
    %101 = arith.addf %99, %100 : vector<8x128xf32>
    %102 = arith.mulf %101, %72 : vector<8x128xf32>
    %cst_40 = arith.constant 5.000000e-01 : f32
    %103 = vector.broadcast %cst_40 : f32 to vector<8x128xf32>
    %104 = arith.mulf %103, %91 : vector<8x128xf32>
    %105 = math.tanh %104 : vector<8x128xf32>
    %cst_41 = arith.constant 5.000000e-01 : f32
    %106 = vector.broadcast %cst_41 : f32 to vector<8x128xf32>
    %107 = arith.mulf %106, %105 : vector<8x128xf32>
    %cst_42 = arith.constant 5.000000e-01 : f32
    %108 = vector.broadcast %cst_42 : f32 to vector<8x128xf32>
    %109 = arith.addf %107, %108 : vector<8x128xf32>
    %110 = math.tanh %93 : vector<8x128xf32>
    %111 = arith.mulf %109, %110 : vector<8x128xf32>
    %112 = arith.addf %102, %111 : vector<8x128xf32>
    %cst_43 = arith.constant 5.000000e-01 : f32
    %113 = vector.broadcast %cst_43 : f32 to vector<8x128xf32>
    %114 = arith.mulf %113, %94 : vector<8x128xf32>
    %115 = math.tanh %114 : vector<8x128xf32>
    %cst_44 = arith.constant 5.000000e-01 : f32
    %116 = vector.broadcast %cst_44 : f32 to vector<8x128xf32>
    %117 = arith.mulf %116, %115 : vector<8x128xf32>
    %cst_45 = arith.constant 5.000000e-01 : f32
    %118 = vector.broadcast %cst_45 : f32 to vector<8x128xf32>
    %119 = arith.addf %117, %118 : vector<8x128xf32>
    %120 = math.tanh %112 : vector<8x128xf32>
    %121 = arith.mulf %119, %120 : vector<8x128xf32>
    %122 = arith.index_cast %c2_i32 : i32 to index
    %c0_46 = arith.constant 0 : index
    %c0_47 = arith.constant 0 : index
    %123 = vector.load %arg6[%122, %c0_46, %c0_47] : memref<8x8x128xf32, #tpu.memory_space<vmem>>, vector<1x8x128xf32>
    %124 = vector.shape_cast %123 : vector<1x8x128xf32> to vector<8x128xf32>
    %125 = vector.shape_cast %121 : vector<8x128xf32> to vector<1x8x128xf32>
    tpu.vector_store %arg6[%122, %c0_46, %c0_47], %125 {strides = array<i32>} : memref<8x8x128xf32, #tpu.memory_space<vmem>>, vector<1x8x128xf32>,
    %c3_i32 = arith.constant 3 : i32
    %126 = arith.index_cast %c3_i32 : i32 to index
    %c0_48 = arith.constant 0 : index
    %c0_49 = arith.constant 0 : index
    %127 = vector.load %arg2[%126, %c0_48, %c0_49] : memref<8x8x512xf32, #tpu.memory_space<vmem>>, vector<1x8x512xf32>
    %128 = vector.shape_cast %127 : vector<1x8x512xf32> to vector<8x512xf32>
    %cst_50 = arith.constant dense<0.000000e+00> : vector<8x512xf32>
    %129 = tpu.matmul %121, %3, %cst_50 {dimension_numbers = #tpu.dot_dimension_numbers<[1], [0], [0], [1], [0, 0, 1, 1], [], []>} : vector<8x128xf32>, vector<128x512xf32>, vector<8x512xf32> -> vector<8x512xf32>
    %130 = arith.addf %128, %129 : vector<8x512xf32>
    %131 = vector.extract_strided_slice %130 {offsets = [0, 0], sizes = [8, 128], strides = [1, 1]} : vector<8x512xf32> to vector<8x128xf32>
    %132 = vector.extract_strided_slice %130 {offsets = [0, 128], sizes = [8, 128], strides = [1, 1]} : vector<8x512xf32> to vector<8x128xf32>
    %133 = vector.extract_strided_slice %130 {offsets = [0, 256], sizes = [8, 128], strides = [1, 1]} : vector<8x512xf32> to vector<8x128xf32>
    %134 = vector.extract_strided_slice %130 {offsets = [0, 384], sizes = [8, 128], strides = [1, 1]} : vector<8x512xf32> to vector<8x128xf32>
    %cst_51 = arith.constant 5.000000e-01 : f32
    %135 = vector.broadcast %cst_51 : f32 to vector<8x128xf32>
    %136 = arith.mulf %135, %132 : vector<8x128xf32>
    %137 = math.tanh %136 : vector<8x128xf32>
    %cst_52 = arith.constant 5.000000e-01 : f32
    %138 = vector.broadcast %cst_52 : f32 to vector<8x128xf32>
    %139 = arith.mulf %138, %137 : vector<8x128xf32>
    %cst_53 = arith.constant 5.000000e-01 : f32
    %140 = vector.broadcast %cst_53 : f32 to vector<8x128xf32>
    %141 = arith.addf %139, %140 : vector<8x128xf32>
    %142 = arith.mulf %141, %112 : vector<8x128xf32>
    %cst_54 = arith.constant 5.000000e-01 : f32
    %143 = vector.broadcast %cst_54 : f32 to vector<8x128xf32>
    %144 = arith.mulf %143, %131 : vector<8x128xf32>
    %145 = math.tanh %144 : vector<8x128xf32>
    %cst_55 = arith.constant 5.000000e-01 : f32
    %146 = vector.broadcast %cst_55 : f32 to vector<8x128xf32>
    %147 = arith.mulf %146, %145 : vector<8x128xf32>
    %cst_56 = arith.constant 5.000000e-01 : f32
    %148 = vector.broadcast %cst_56 : f32 to vector<8x128xf32>
    %149 = arith.addf %147, %148 : vector<8x128xf32>
    %150 = math.tanh %133 : vector<8x128xf32>
    %151 = arith.mulf %149, %150 : vector<8x128xf32>
    %152 = arith.addf %142, %151 : vector<8x128xf32>
    %cst_57 = arith.constant 5.000000e-01 : f32
    %153 = vector.broadcast %cst_57 : f32 to vector<8x128xf32>
    %154 = arith.mulf %153, %134 : vector<8x128xf32>
    %155 = math.tanh %154 : vector<8x128xf32>
    %cst_58 = arith.constant 5.000000e-01 : f32
    %156 = vector.broadcast %cst_58 : f32 to vector<8x128xf32>
    %157 = arith.mulf %156, %155 : vector<8x128xf32>
    %cst_59 = arith.constant 5.000000e-01 : f32
    %158 = vector.broadcast %cst_59 : f32 to vector<8x128xf32>
    %159 = arith.addf %157, %158 : vector<8x128xf32>
    %160 = math.tanh %152 : vector<8x128xf32>
    %161 = arith.mulf %159, %160 : vector<8x128xf32>
    %162 = arith.index_cast %c3_i32 : i32 to index
    %c0_60 = arith.constant 0 : index
    %c0_61 = arith.constant 0 : index
    %163 = vector.load %arg6[%162, %c0_60, %c0_61] : memref<8x8x128xf32, #tpu.memory_space<vmem>>, vector<1x8x128xf32>
    %164 = vector.shape_cast %163 : vector<1x8x128xf32> to vector<8x128xf32>
    %165 = vector.shape_cast %161 : vector<8x128xf32> to vector<1x8x128xf32>
    tpu.vector_store %arg6[%162, %c0_60, %c0_61], %165 {strides = array<i32>} : memref<8x8x128xf32, #tpu.memory_space<vmem>>, vector<1x8x128xf32>,
    %c4_i32 = arith.constant 4 : i32
    %166 = arith.index_cast %c4_i32 : i32 to index
    %c0_62 = arith.constant 0 : index
    %c0_63 = arith.constant 0 : index
    %167 = vector.load %arg2[%166, %c0_62, %c0_63] : memref<8x8x512xf32, #tpu.memory_space<vmem>>, vector<1x8x512xf32>
    %168 = vector.shape_cast %167 : vector<1x8x512xf32> to vector<8x512xf32>
    %cst_64 = arith.constant dense<0.000000e+00> : vector<8x512xf32>
    %169 = tpu.matmul %161, %3, %cst_64 {dimension_numbers = #tpu.dot_dimension_numbers<[1], [0], [0], [1], [0, 0, 1, 1], [], []>} : vector<8x128xf32>, vector<128x512xf32>, vector<8x512xf32> -> vector<8x512xf32>
    %170 = arith.addf %168, %169 : vector<8x512xf32>
    %171 = vector.extract_strided_slice %170 {offsets = [0, 0], sizes = [8, 128], strides = [1, 1]} : vector<8x512xf32> to vector<8x128xf32>
    %172 = vector.extract_strided_slice %170 {offsets = [0, 128], sizes = [8, 128], strides = [1, 1]} : vector<8x512xf32> to vector<8x128xf32>
    %173 = vector.extract_strided_slice %170 {offsets = [0, 256], sizes = [8, 128], strides = [1, 1]} : vector<8x512xf32> to vector<8x128xf32>
    %174 = vector.extract_strided_slice %170 {offsets = [0, 384], sizes = [8, 128], strides = [1, 1]} : vector<8x512xf32> to vector<8x128xf32>
    %cst_65 = arith.constant 5.000000e-01 : f32
    %175 = vector.broadcast %cst_65 : f32 to vector<8x128xf32>
    %176 = arith.mulf %175, %172 : vector<8x128xf32>
    %177 = math.tanh %176 : vector<8x128xf32>
    %cst_66 = arith.constant 5.000000e-01 : f32
    %178 = vector.broadcast %cst_66 : f32 to vector<8x128xf32>
    %179 = arith.mulf %178, %177 : vector<8x128xf32>
    %cst_67 = arith.constant 5.000000e-01 : f32
    %180 = vector.broadcast %cst_67 : f32 to vector<8x128xf32>
    %181 = arith.addf %179, %180 : vector<8x128xf32>
    %182 = arith.mulf %181, %152 : vector<8x128xf32>
    %cst_68 = arith.constant 5.000000e-01 : f32
    %183 = vector.broadcast %cst_68 : f32 to vector<8x128xf32>
    %184 = arith.mulf %183, %171 : vector<8x128xf32>
    %185 = math.tanh %184 : vector<8x128xf32>
    %cst_69 = arith.constant 5.000000e-01 : f32
    %186 = vector.broadcast %cst_69 : f32 to vector<8x128xf32>
    %187 = arith.mulf %186, %185 : vector<8x128xf32>
    %cst_70 = arith.constant 5.000000e-01 : f32
    %188 = vector.broadcast %cst_70 : f32 to vector<8x128xf32>
    %189 = arith.addf %187, %188 : vector<8x128xf32>
    %190 = math.tanh %173 : vector<8x128xf32>
    %191 = arith.mulf %189, %190 : vector<8x128xf32>
    %192 = arith.addf %182, %191 : vector<8x128xf32>
    %cst_71 = arith.constant 5.000000e-01 : f32
    %193 = vector.broadcast %cst_71 : f32 to vector<8x128xf32>
    %194 = arith.mulf %193, %174 : vector<8x128xf32>
    %195 = math.tanh %194 : vector<8x128xf32>
    %cst_72 = arith.constant 5.000000e-01 : f32
    %196 = vector.broadcast %cst_72 : f32 to vector<8x128xf32>
    %197 = arith.mulf %196, %195 : vector<8x128xf32>
    %cst_73 = arith.constant 5.000000e-01 : f32
    %198 = vector.broadcast %cst_73 : f32 to vector<8x128xf32>
    %199 = arith.addf %197, %198 : vector<8x128xf32>
    %200 = math.tanh %192 : vector<8x128xf32>
    %201 = arith.mulf %199, %200 : vector<8x128xf32>
    %202 = arith.index_cast %c4_i32 : i32 to index
    %c0_74 = arith.constant 0 : index
    %c0_75 = arith.constant 0 : index
    %203 = vector.load %arg6[%202, %c0_74, %c0_75] : memref<8x8x128xf32, #tpu.memory_space<vmem>>, vector<1x8x128xf32>
    %204 = vector.shape_cast %203 : vector<1x8x128xf32> to vector<8x128xf32>
    %205 = vector.shape_cast %201 : vector<8x128xf32> to vector<1x8x128xf32>
    tpu.vector_store %arg6[%202, %c0_74, %c0_75], %205 {strides = array<i32>} : memref<8x8x128xf32, #tpu.memory_space<vmem>>, vector<1x8x128xf32>,
    %c5_i32 = arith.constant 5 : i32
    %206 = arith.index_cast %c5_i32 : i32 to index
    %c0_76 = arith.constant 0 : index
    %c0_77 = arith.constant 0 : index
    %207 = vector.load %arg2[%206, %c0_76, %c0_77] : memref<8x8x512xf32, #tpu.memory_space<vmem>>, vector<1x8x512xf32>
    %208 = vector.shape_cast %207 : vector<1x8x512xf32> to vector<8x512xf32>
    %cst_78 = arith.constant dense<0.000000e+00> : vector<8x512xf32>
    %209 = tpu.matmul %201, %3, %cst_78 {dimension_numbers = #tpu.dot_dimension_numbers<[1], [0], [0], [1], [0, 0, 1, 1], [], []>} : vector<8x128xf32>, vector<128x512xf32>, vector<8x512xf32> -> vector<8x512xf32>
    %210 = arith.addf %208, %209 : vector<8x512xf32>
    %211 = vector.extract_strided_slice %210 {offsets = [0, 0], sizes = [8, 128], strides = [1, 1]} : vector<8x512xf32> to vector<8x128xf32>
    %212 = vector.extract_strided_slice %210 {offsets = [0, 128], sizes = [8, 128], strides = [1, 1]} : vector<8x512xf32> to vector<8x128xf32>
    %213 = vector.extract_strided_slice %210 {offsets = [0, 256], sizes = [8, 128], strides = [1, 1]} : vector<8x512xf32> to vector<8x128xf32>
    %214 = vector.extract_strided_slice %210 {offsets = [0, 384], sizes = [8, 128], strides = [1, 1]} : vector<8x512xf32> to vector<8x128xf32>
    %cst_79 = arith.constant 5.000000e-01 : f32
    %215 = vector.broadcast %cst_79 : f32 to vector<8x128xf32>
    %216 = arith.mulf %215, %212 : vector<8x128xf32>
    %217 = math.tanh %216 : vector<8x128xf32>
    %cst_80 = arith.constant 5.000000e-01 : f32
    %218 = vector.broadcast %cst_80 : f32 to vector<8x128xf32>
    %219 = arith.mulf %218, %217 : vector<8x128xf32>
    %cst_81 = arith.constant 5.000000e-01 : f32
    %220 = vector.broadcast %cst_81 : f32 to vector<8x128xf32>
    %221 = arith.addf %219, %220 : vector<8x128xf32>
    %222 = arith.mulf %221, %192 : vector<8x128xf32>
    %cst_82 = arith.constant 5.000000e-01 : f32
    %223 = vector.broadcast %cst_82 : f32 to vector<8x128xf32>
    %224 = arith.mulf %223, %211 : vector<8x128xf32>
    %225 = math.tanh %224 : vector<8x128xf32>
    %cst_83 = arith.constant 5.000000e-01 : f32
    %226 = vector.broadcast %cst_83 : f32 to vector<8x128xf32>
    %227 = arith.mulf %226, %225 : vector<8x128xf32>
    %cst_84 = arith.constant 5.000000e-01 : f32
    %228 = vector.broadcast %cst_84 : f32 to vector<8x128xf32>
    %229 = arith.addf %227, %228 : vector<8x128xf32>
    %230 = math.tanh %213 : vector<8x128xf32>
    %231 = arith.mulf %229, %230 : vector<8x128xf32>
    %232 = arith.addf %222, %231 : vector<8x128xf32>
    %cst_85 = arith.constant 5.000000e-01 : f32
    %233 = vector.broadcast %cst_85 : f32 to vector<8x128xf32>
    %234 = arith.mulf %233, %214 : vector<8x128xf32>
    %235 = math.tanh %234 : vector<8x128xf32>
    %cst_86 = arith.constant 5.000000e-01 : f32
    %236 = vector.broadcast %cst_86 : f32 to vector<8x128xf32>
    %237 = arith.mulf %236, %235 : vector<8x128xf32>
    %cst_87 = arith.constant 5.000000e-01 : f32
    %238 = vector.broadcast %cst_87 : f32 to vector<8x128xf32>
    %239 = arith.addf %237, %238 : vector<8x128xf32>
    %240 = math.tanh %232 : vector<8x128xf32>
    %241 = arith.mulf %239, %240 : vector<8x128xf32>
    %242 = arith.index_cast %c5_i32 : i32 to index
    %c0_88 = arith.constant 0 : index
    %c0_89 = arith.constant 0 : index
    %243 = vector.load %arg6[%242, %c0_88, %c0_89] : memref<8x8x128xf32, #tpu.memory_space<vmem>>, vector<1x8x128xf32>
    %244 = vector.shape_cast %243 : vector<1x8x128xf32> to vector<8x128xf32>
    %245 = vector.shape_cast %241 : vector<8x128xf32> to vector<1x8x128xf32>
    tpu.vector_store %arg6[%242, %c0_88, %c0_89], %245 {strides = array<i32>} : memref<8x8x128xf32, #tpu.memory_space<vmem>>, vector<1x8x128xf32>,
    %c6_i32 = arith.constant 6 : i32
    %246 = arith.index_cast %c6_i32 : i32 to index
    %c0_90 = arith.constant 0 : index
    %c0_91 = arith.constant 0 : index
    %247 = vector.load %arg2[%246, %c0_90, %c0_91] : memref<8x8x512xf32, #tpu.memory_space<vmem>>, vector<1x8x512xf32>
    %248 = vector.shape_cast %247 : vector<1x8x512xf32> to vector<8x512xf32>
    %cst_92 = arith.constant dense<0.000000e+00> : vector<8x512xf32>
    %249 = tpu.matmul %241, %3, %cst_92 {dimension_numbers = #tpu.dot_dimension_numbers<[1], [0], [0], [1], [0, 0, 1, 1], [], []>} : vector<8x128xf32>, vector<128x512xf32>, vector<8x512xf32> -> vector<8x512xf32>
    %250 = arith.addf %248, %249 : vector<8x512xf32>
    %251 = vector.extract_strided_slice %250 {offsets = [0, 0], sizes = [8, 128], strides = [1, 1]} : vector<8x512xf32> to vector<8x128xf32>
    %252 = vector.extract_strided_slice %250 {offsets = [0, 128], sizes = [8, 128], strides = [1, 1]} : vector<8x512xf32> to vector<8x128xf32>
    %253 = vector.extract_strided_slice %250 {offsets = [0, 256], sizes = [8, 128], strides = [1, 1]} : vector<8x512xf32> to vector<8x128xf32>
    %254 = vector.extract_strided_slice %250 {offsets = [0, 384], sizes = [8, 128], strides = [1, 1]} : vector<8x512xf32> to vector<8x128xf32>
    %cst_93 = arith.constant 5.000000e-01 : f32
    %255 = vector.broadcast %cst_93 : f32 to vector<8x128xf32>
    %256 = arith.mulf %255, %252 : vector<8x128xf32>
    %257 = math.tanh %256 : vector<8x128xf32>
    %cst_94 = arith.constant 5.000000e-01 : f32
    %258 = vector.broadcast %cst_94 : f32 to vector<8x128xf32>
    %259 = arith.mulf %258, %257 : vector<8x128xf32>
    %cst_95 = arith.constant 5.000000e-01 : f32
    %260 = vector.broadcast %cst_95 : f32 to vector<8x128xf32>
    %261 = arith.addf %259, %260 : vector<8x128xf32>
    %262 = arith.mulf %261, %232 : vector<8x128xf32>
    %cst_96 = arith.constant 5.000000e-01 : f32
    %263 = vector.broadcast %cst_96 : f32 to vector<8x128xf32>
    %264 = arith.mulf %263, %251 : vector<8x128xf32>
    %265 = math.tanh %264 : vector<8x128xf32>
    %cst_97 = arith.constant 5.000000e-01 : f32
    %266 = vector.broadcast %cst_97 : f32 to vector<8x128xf32>
    %267 = arith.mulf %266, %265 : vector<8x128xf32>
    %cst_98 = arith.constant 5.000000e-01 : f32
    %268 = vector.broadcast %cst_98 : f32 to vector<8x128xf32>
    %269 = arith.addf %267, %268 : vector<8x128xf32>
    %270 = math.tanh %253 : vector<8x128xf32>
    %271 = arith.mulf %269, %270 : vector<8x128xf32>
    %272 = arith.addf %262, %271 : vector<8x128xf32>
    %cst_99 = arith.constant 5.000000e-01 : f32
    %273 = vector.broadcast %cst_99 : f32 to vector<8x128xf32>
    %274 = arith.mulf %273, %254 : vector<8x128xf32>
    %275 = math.tanh %274 : vector<8x128xf32>
    %cst_100 = arith.constant 5.000000e-01 : f32
    %276 = vector.broadcast %cst_100 : f32 to vector<8x128xf32>
    %277 = arith.mulf %276, %275 : vector<8x128xf32>
    %cst_101 = arith.constant 5.000000e-01 : f32
    %278 = vector.broadcast %cst_101 : f32 to vector<8x128xf32>
    %279 = arith.addf %277, %278 : vector<8x128xf32>
    %280 = math.tanh %272 : vector<8x128xf32>
    %281 = arith.mulf %279, %280 : vector<8x128xf32>
    %282 = arith.index_cast %c6_i32 : i32 to index
    %c0_102 = arith.constant 0 : index
    %c0_103 = arith.constant 0 : index
    %283 = vector.load %arg6[%282, %c0_102, %c0_103] : memref<8x8x128xf32, #tpu.memory_space<vmem>>, vector<1x8x128xf32>
    %284 = vector.shape_cast %283 : vector<1x8x128xf32> to vector<8x128xf32>
    %285 = vector.shape_cast %281 : vector<8x128xf32> to vector<1x8x128xf32>
    tpu.vector_store %arg6[%282, %c0_102, %c0_103], %285 {strides = array<i32>} : memref<8x8x128xf32, #tpu.memory_space<vmem>>, vector<1x8x128xf32>,
    %c7_i32 = arith.constant 7 : i32
    %286 = arith.index_cast %c7_i32 : i32 to index
    %c0_104 = arith.constant 0 : index
    %c0_105 = arith.constant 0 : index
    %287 = vector.load %arg2[%286, %c0_104, %c0_105] : memref<8x8x512xf32, #tpu.memory_space<vmem>>, vector<1x8x512xf32>
    %288 = vector.shape_cast %287 : vector<1x8x512xf32> to vector<8x512xf32>
    %cst_106 = arith.constant dense<0.000000e+00> : vector<8x512xf32>
    %289 = tpu.matmul %281, %3, %cst_106 {dimension_numbers = #tpu.dot_dimension_numbers<[1], [0], [0], [1], [0, 0, 1, 1], [], []>} : vector<8x128xf32>, vector<128x512xf32>, vector<8x512xf32> -> vector<8x512xf32>
    %290 = arith.addf %288, %289 : vector<8x512xf32>
    %291 = vector.extract_strided_slice %290 {offsets = [0, 0], sizes = [8, 128], strides = [1, 1]} : vector<8x512xf32> to vector<8x128xf32>
    %292 = vector.extract_strided_slice %290 {offsets = [0, 128], sizes = [8, 128], strides = [1, 1]} : vector<8x512xf32> to vector<8x128xf32>
    %293 = vector.extract_strided_slice %290 {offsets = [0, 256], sizes = [8, 128], strides = [1, 1]} : vector<8x512xf32> to vector<8x128xf32>
    %294 = vector.extract_strided_slice %290 {offsets = [0, 384], sizes = [8, 128], strides = [1, 1]} : vector<8x512xf32> to vector<8x128xf32>
    %cst_107 = arith.constant 5.000000e-01 : f32
    %295 = vector.broadcast %cst_107 : f32 to vector<8x128xf32>
    %296 = arith.mulf %295, %292 : vector<8x128xf32>
    %297 = math.tanh %296 : vector<8x128xf32>
    %cst_108 = arith.constant 5.000000e-01 : f32
    %298 = vector.broadcast %cst_108 : f32 to vector<8x128xf32>
    %299 = arith.mulf %298, %297 : vector<8x128xf32>
    %cst_109 = arith.constant 5.000000e-01 : f32
    %300 = vector.broadcast %cst_109 : f32 to vector<8x128xf32>
    %301 = arith.addf %299, %300 : vector<8x128xf32>
    %302 = arith.mulf %301, %272 : vector<8x128xf32>
    %cst_110 = arith.constant 5.000000e-01 : f32
    %303 = vector.broadcast %cst_110 : f32 to vector<8x128xf32>
    %304 = arith.mulf %303, %291 : vector<8x128xf32>
    %305 = math.tanh %304 : vector<8x128xf32>
    %cst_111 = arith.constant 5.000000e-01 : f32
    %306 = vector.broadcast %cst_111 : f32 to vector<8x128xf32>
    %307 = arith.mulf %306, %305 : vector<8x128xf32>
    %cst_112 = arith.constant 5.000000e-01 : f32
    %308 = vector.broadcast %cst_112 : f32 to vector<8x128xf32>
    %309 = arith.addf %307, %308 : vector<8x128xf32>
    %310 = math.tanh %293 : vector<8x128xf32>
    %311 = arith.mulf %309, %310 : vector<8x128xf32>
    %312 = arith.addf %302, %311 : vector<8x128xf32>
    %cst_113 = arith.constant 5.000000e-01 : f32
    %313 = vector.broadcast %cst_113 : f32 to vector<8x128xf32>
    %314 = arith.mulf %313, %294 : vector<8x128xf32>
    %315 = math.tanh %314 : vector<8x128xf32>
    %cst_114 = arith.constant 5.000000e-01 : f32
    %316 = vector.broadcast %cst_114 : f32 to vector<8x128xf32>
    %317 = arith.mulf %316, %315 : vector<8x128xf32>
    %cst_115 = arith.constant 5.000000e-01 : f32
    %318 = vector.broadcast %cst_115 : f32 to vector<8x128xf32>
    %319 = arith.addf %317, %318 : vector<8x128xf32>
    %320 = math.tanh %312 : vector<8x128xf32>
    %321 = arith.mulf %319, %320 : vector<8x128xf32>
    %322 = arith.index_cast %c7_i32 : i32 to index
    %c0_116 = arith.constant 0 : index
    %c0_117 = arith.constant 0 : index
    %323 = vector.load %arg6[%322, %c0_116, %c0_117] : memref<8x8x128xf32, #tpu.memory_space<vmem>>, vector<1x8x128xf32>
    %324 = vector.shape_cast %323 : vector<1x8x128xf32> to vector<8x128xf32>
    %325 = vector.shape_cast %321 : vector<8x128xf32> to vector<1x8x128xf32>
    tpu.vector_store %arg6[%322, %c0_116, %c0_117], %325 {strides = array<i32>} : memref<8x8x128xf32, #tpu.memory_space<vmem>>, vector<1x8x128xf32>,
    %c8_i32 = arith.constant 8 : i32
    %c0_118 = arith.constant 0 : index
    %c0_119 = arith.constant 0 : index
    %326 = vector.load %arg8[%c0_118, %c0_119] : memref<8x128xf32, #tpu.memory_space<vmem>>, vector<8x128xf32>
    tpu.vector_store %arg8[%c0_118, %c0_119], %321 {strides = array<i32>} : memref<8x128xf32, #tpu.memory_space<vmem>>, vector<8x128xf32>,
    %c0_120 = arith.constant 0 : index
    %c0_121 = arith.constant 0 : index
    %327 = vector.load %arg9[%c0_120, %c0_121] : memref<8x128xf32, #tpu.memory_space<vmem>>, vector<8x128xf32>
    tpu.vector_store %arg9[%c0_120, %c0_121], %312 {strides = array<i32>} : memref<8x128xf32, #tpu.memory_space<vmem>>, vector<8x128xf32>,
    %c0_122 = arith.constant 0 : index
    %c0_123 = arith.constant 0 : index
    %328 = vector.load %arg7[%c0_122, %c0_123] : memref<8x128xf32, #tpu.memory_space<vmem>>, vector<8x128xf32>
    tpu.vector_store %arg7[%c0_122, %c0_123], %312 {strides = array<i32>} : memref<8x128xf32, #tpu.memory_space<vmem>>, vector<8x128xf32>,
    return
  }
  func.func @transform_0(%arg0: i32, %arg1: i32) -> (i32, i32, i32) {
    %c0_i32 = arith.constant 0 : i32
    %c0_i32_0 = arith.constant 0 : i32
    return %arg1, %arg0, %c0_i32 : i32, i32, i32
  }
  func.func @transform_1(%arg0: i32, %arg1: i32) -> (i32, i32) {
    %c0_i32 = arith.constant 0 : i32
    %c0_i32_0 = arith.constant 0 : i32
    return %arg0, %c0_i32 : i32, i32
  }
  func.func @transform_2(%arg0: i32, %arg1: i32) -> (i32, i32) {
    %c0_i32 = arith.constant 0 : i32
    %c0_i32_0 = arith.constant 0 : i32
    return %arg0, %c0_i32 : i32, i32
  }
  func.func @transform_3(%arg0: i32, %arg1: i32) -> (i32, i32) {
    %c0_i32 = arith.constant 0 : i32
    %c0_i32_0 = arith.constant 0 : i32
    %c0_i32_1 = arith.constant 0 : i32
    return %c0_i32, %c0_i32_0 : i32, i32
  }
  func.func @transform_4(%arg0: i32, %arg1: i32) -> (i32, i32, i32) {
    %c0_i32 = arith.constant 0 : i32
    %c0_i32_0 = arith.constant 0 : i32
    return %arg1, %arg0, %c0_i32 : i32, i32, i32
  }
  func.func @transform_5(%arg0: i32, %arg1: i32) -> (i32, i32) {
    %c0_i32 = arith.constant 0 : i32
    %c0_i32_0 = arith.constant 0 : i32
    return %arg0, %c0_i32 : i32, i32
  }
}

</mosaic_0001>

<llo_original>
// kernel: sqa_lstm_forward.2
$region0: #{sqa_lstm_forward.2}
  #allocation0 [shape = 'u32[]', space=smem, size = 0x4, offset = 0x4, fixed_abs, tag = 'smem constant byte address 0x4 - core index']
  #allocation1 [shape = 'u32[144,128]{1,0:T(1,128)}', space=vmem, size = 0x12000, scoped, tag = 'internal scratch']
  #allocation2 [shape = 'f32[8,128]{1,0:T(8,128)}', space=vmem, size = 0x1000, scoped, tag = 'scratch operand']
  #allocation3 [shape = 'f32[8,128]{1,0:T(8,128)}', space=vmem, size = 0x1000, scoped, tag = 'scratch operand']
  %s0 = inlined_call_operand.hbm [shape: f32[16,16,512], index: 0, kind: input, shape index: {}]
  %s1 = inlined_call_operand.hbm [shape: f32[16,128], index: 1, kind: input, shape index: {}]
  %s2 = inlined_call_operand.hbm [shape: f32[16,128], index: 2, kind: input, shape index: {}]
  %s3 = inlined_call_operand.hbm [shape: f32[128,512], index: 3, kind: input, shape index: {}]
  %s4 = inlined_call_operand.hbm [shape: f32[16,16,128], index: 4, kind: output, shape index: {0}]
  %s5 = inlined_call_operand.hbm [shape: f32[16,128], index: 5, kind: output, shape index: {1}]
  %6 = xla_tuple %s4, %s5
  %s7 = sld [smem:[#allocation0]]
  $region77: #{sqa_lstm_forward.2} parent=0
    _
  %s9 = ssub.s32 1, %s7
  %s10 = scalar_select 0, %s9, %s7
  $region1: #{sqa_lstm_forward.2} parent=0
    #allocation4 [shape = 'u8[262144]{0}', space=vmem, size = 0x40000, scoped, tag = 'input window, operand 0']
    #allocation5 [shape = 's32[2]{0}', space=sflag, size = 0x8, scoped, tag = 'scoped memory for sqa_lstm_forward.2']
    #allocation6 [shape = 's32[2]{0}', space=sflag, size = 0x8, scoped, tag = 'scoped memory for sqa_lstm_forward.2']
    #allocation7 [shape = 'u8[8192]{0}', space=vmem, size = 0x2000, scoped, tag = 'input window, operand 1']
    #allocation8 [shape = 's32[2]{0}', space=sflag, size = 0x8, scoped, tag = 'scoped memory for sqa_lstm_forward.2']
    #allocation9 [shape = 'u8[8192]{0}', space=vmem, size = 0x2000, scoped, tag = 'input window, operand 2']
    #allocation10 [shape = 'u8[262144]{0}', space=vmem, size = 0x40000, scoped, tag = 'input window, operand 3, single buffered']
    #allocation11 [shape = 's32[1]{0}', space=sflag, size = 0x4, scoped, tag = 'scoped memory for sqa_lstm_forward.2']
    #allocation12 [shape = 'u8[65536]{0}', space=vmem, size = 0x10000, scoped, tag = 'output window, operand 0']
    #allocation13 [shape = 'u8[8192]{0}', space=vmem, size = 0x2000, scoped, tag = 'output window, operand 1']
    #allocation14 [shape = 's32[2]{0}', space=sflag, size = 0x8, scoped, tag = 'scoped memory for sqa_lstm_forward.2']
    %11 = vsyncpa [#allocation5], 0
    %s12 = scalar_lea.sflag [#allocation5], 1
    %13 = vsyncpa %s12, 0
    %14 = vsyncpa [#allocation8], 0
    %s15 = scalar_lea.sflag [#allocation8], 1
    %16 = vsyncpa %s15, 0
    %17 = vsyncpa [#allocation11], 0
    %18 = vsyncpa [#allocation6], 0
    %s19 = scalar_lea.sflag [#allocation6], 1
    %20 = vsyncpa %s19, 0
    %21 = vsyncpa [#allocation14], 0
    %s22 = scalar_lea.sflag [#allocation14], 1
    %23 = vsyncpa %s22, 0
    loop: start=0, step=1, limit=6
    $region2: #{sqa_lstm_forward.2} parent=1 // loop_pre_header
      _
    $region3: #{sqa_lstm_forward.2} parent=1 // loop_header
      %s25 = sphi 0, %s29
      %p26 = scmp.ge.s32.totalorder %s25, 6
      %s32 = sphi 0, %s44
      %s33 = sphi 0, %s40
      %s34 = sphi 0, %s32
      %s35 = sphi 0, %s33
      %s36 = sphi 0, %s34
      %s37 = sphi 0, %s35
      %s49 = sphi 0, %s51
      %s52 = sphi 0, %s49
      %s53 = sphi 0, %s52
      %s69 = sphi 0, %s53
      %s75 = sphi 0, %s77
      %s78 = sphi 0, %s75
      %s79 = sphi 0, %s78
      %s95 = sphi 0, %s79
      %s101 = sphi 0, %s103
      %s104 = sphi 0, %s101
      %s105 = sphi 0, %s104
      %s121 = sphi 0, %s105
      %s125 = sphi 0, %s125
      %s127 = sphi 0, %s125
      %s128 = sphi 0, %s127
      %s142 = sphi 0, %s128
      %s150 = sphi 0, %s152
      %s153 = sphi 0, %s150
      %s154 = sphi 0, %s153
      %s170 = sphi 0, %s154
      %s176 = sphi 0, %s178
      %s179 = sphi 0, %s176
      %s180 = sphi 0, %s179
      %s196 = sphi 0, %s180
    $region4: #{sqa_lstm_forward.2} parent=1 // loop_header_branch
      %28 = sbr.rel (%p26) target = $region8
    $region5: #{sqa_lstm_forward.2} parent=1 // loop_body
      %s30 = ssub.s32 %s25, 1
      %s31 = ssub.s32 %s25, 2
      %s38 = sadd.s32 1, %s33
      %p39 = scmp.ge.s32.totalorder %s38, 2
      %s40 = scalar_select %p39, 0, %s38
      %s41 = sadd.s32 1, %s32
      %s42 = scalar_select %p39, %s41, %s32
      %p43 = scmp.ge.s32.totalorder %s42, 2
      %s44 = scalar_select %p43, 0, %s42
      %s45 = ssub.s32 %s33, %s40
      %s46 = ssub.s32 %s32, %s44
      %s47 = sor.u32 %s45, %s46
      %p48 = scmp.eq.s32.totalorder %s47, 0
      %s50 = sadd.s32 %s49, 1
      %s51 = scalar_select %p48, %s49, %s50
      %p54 = pneg %p48
      %p55 = scmp.eq.s32.totalorder %s25, 3
      %p56 = por %p54, %p55
      %p57 = scmp.ne.s32.totalorder %s49, %s52
      %p58 = scmp.eq.s32.totalorder %s25, 0
      %p59 = por %p57, %p58
      %p60 = scmp.ne.s32.totalorder %s49, %s52
      %p61 = scmp.eq.s32.totalorder %s30, 3
      %p62 = por %p60, %p61
      %p63 = scmp.ne.s32.totalorder %s52, %s53
      %p64 = scmp.eq.s32.totalorder %s30, 0
      %p65 = por %p63, %p64
      %p66 = scmp.ne.s32.totalorder %s52, %s53
      %p67 = scmp.eq.s32.totalorder %s31, 3
      %p68 = por %p66, %p67
      %p70 = scmp.ne.s32.totalorder %s53, %s69
      %p71 = scmp.eq.s32.totalorder %s31, 0
      %p72 = por %p70, %p71
      %s73 = ssub.s32 %s32, %s44
      %p74 = scmp.eq.s32.totalorder %s73, 0
      %s76 = sadd.s32 %s75, 1
      %s77 = scalar_select %p74, %s75, %s76
      %p80 = pneg %p74
      %p81 = scmp.eq.s32.totalorder %s25, 3
      %p82 = por %p80, %p81
      %p83 = scmp.ne.s32.totalorder %s75, %s78
      %p84 = scmp.eq.s32.totalorder %s25, 0
      %p85 = por %p83, %p84
      %p86 = scmp.ne.s32.totalorder %s75, %s78
      %p87 = scmp.eq.s32.totalorder %s30, 3
      %p88 = por %p86, %p87
      %p89 = scmp.ne.s32.totalorder %s78, %s79
      %p90 = scmp.eq.s32.totalorder %s30, 0
      %p91 = por %p89, %p90
      %p92 = scmp.ne.s32.totalorder %s78, %s79
      %p93 = scmp.eq.s32.totalorder %s31, 3
      %p94 = por %p92, %p93
      %p96 = scmp.ne.s32.totalorder %s79, %s95
      %p97 = scmp.eq.s32.totalorder %s31, 0
      %p98 = por %p96, %p97
      %s99 = ssub.s32 %s32, %s44
      %p100 = scmp.eq.s32.totalorder %s99, 0
      %s102 = sadd.s32 %s101, 1
      %s103 = scalar_select %p100, %s101, %s102
      %p106 = pneg %p100
      %p107 = scmp.eq.s32.totalorder %s25, 3
      %p108 = por %p106, %p107
      %p109 = scmp.ne.s32.totalorder %s101, %s104
      %p110 = scmp.eq.s32.totalorder %s25, 0
      %p111 = por %p109, %p110
      %p112 = scmp.ne.s32.totalorder %s101, %s104
      %p113 = scmp.eq.s32.totalorder %s30, 3
      %p114 = por %p112, %p113
      %p115 = scmp.ne.s32.totalorder %s104, %s105
      %p116 = scmp.eq.s32.totalorder %s30, 0
      %p117 = por %p115, %p116
      %p118 = scmp.ne.s32.totalorder %s104, %s105
      %p119 = scmp.eq.s32.totalorder %s31, 3
      %p120 = por %p118, %p119
      %p122 = scmp.ne.s32.totalorder %s105, %s121
      %p123 = scmp.eq.s32.totalorder %s31, 0
      %p124 = por %p122, %p123
      %s126 = sadd.s32 %s125, 1
      %p129 = scmp.eq.s32.totalorder %s25, 3
      %p130 = scmp.ne.s32.totalorder %s125, %s127
      %p131 = scmp.eq.s32.totalorder %s25, 0
      %p132 = por %p130, %p131
      %p133 = scmp.ne.s32.totalorder %s125, %s127
      %p134 = scmp.eq.s32.totalorder %s30, 3
      %p135 = por %p133, %p134
      %p136 = scmp.ne.s32.totalorder %s127, %s128
      %p137 = scmp.eq.s32.totalorder %s30, 0
      %p138 = por %p136, %p137
      %p139 = scmp.ne.s32.totalorder %s127, %s128
      %p140 = scmp.eq.s32.totalorder %s31, 3
      %p141 = por %p139, %p140
      %p143 = scmp.ne.s32.totalorder %s128, %s142
      %p144 = scmp.eq.s32.totalorder %s31, 0
      %p145 = por %p143, %p144
      %s146 = ssub.s32 %s33, %s40
      %s147 = ssub.s32 %s32, %s44
      %s148 = sor.u32 %s146, %s147
      %p149 = scmp.eq.s32.totalorder %s148, 0
      %s151 = sadd.s32 %s150, 1
      %s152 = scalar_select %p149, %s150, %s151
      %p155 = pneg %p149
      %p156 = scmp.eq.s32.totalorder %s25, 3
      %p157 = por %p155, %p156
      %p158 = scmp.ne.s32.totalorder %s150, %s153
      %p159 = scmp.eq.s32.totalorder %s25, 0
      %p160 = por %p158, %p159
      %p161 = scmp.ne.s32.totalorder %s150, %s153
      %p162 = scmp.eq.s32.totalorder %s30, 3
      %p163 = por %p161, %p162
      %p164 = scmp.ne.s32.totalorder %s153, %s154
      %p165 = scmp.eq.s32.totalorder %s30, 0
      %p166 = por %p164, %p165
      %p167 = scmp.ne.s32.totalorder %s153, %s154
      %p168 = scmp.eq.s32.totalorder %s31, 3
      %p169 = por %p167, %p168
      %p171 = scmp.ne.s32.totalorder %s154, %s170
      %p172 = scmp.eq.s32.totalorder %s31, 0
      %p173 = por %p171, %p172
      %s174 = ssub.s32 %s32, %s44
      %p175 = scmp.eq.s32.totalorder %s174, 0
      %s177 = sadd.s32 %s176, 1
      %s178 = scalar_select %p175, %s176, %s177
      %p181 = pneg %p175
      %p182 = scmp.eq.s32.totalorder %s25, 3
      %p183 = por %p181, %p182
      %p184 = scmp.ne.s32.totalorder %s176, %s179
      %p185 = scmp.eq.s32.totalorder %s25, 0
      %p186 = por %p184, %p185
      %p187 = scmp.ne.s32.totalorder %s176, %s179
      %p188 = scmp.eq.s32.totalorder %s30, 3
      %p189 = por %p187, %p188
      %p190 = scmp.ne.s32.totalorder %s179, %s180
      %p191 = scmp.eq.s32.totalorder %s30, 0
      %p192 = por %p190, %p191
      %p193 = scmp.ne.s32.totalorder %s179, %s180
      %p194 = scmp.eq.s32.totalorder %s31, 3
      %p195 = por %p193, %p194
      %p197 = scmp.ne.s32.totalorder %s180, %s196
      %p198 = scmp.eq.s32.totalorder %s31, 0
      %p199 = por %p197, %p198
      %p200 = scmp.le.s32.totalorder 1, %s25
      %p201 = scmp.lt.s32.totalorder %s25, 5
      %p202 = pnand %p200, %p201
      %p203 = pneg %p202
      // Predicated region
      $region9: #{sqa_lstm_forward.2} parent=5 // pred_check
        _
      $region10: #{sqa_lstm_forward.2} parent=5 // pred_check_branch
        %205 = sbr.rel (%p202) target = $region12
      $region11: #{sqa_lstm_forward.2} parent=5 // pred_region
        %s206 = ssub.s32 %s25, 1
        // Predicated region
        $region13: #{sqa_lstm_forward.2} parent=11 // pred_check
          %p207 = pneg %p138
        $region14: #{sqa_lstm_forward.2} parent=11 // pred_check_branch
          %209 = sbr.rel (%p207) target = $region16
        $region15: #{sqa_lstm_forward.2} parent=11 // pred_region
          %s211 = ssub.s32 8192, 8192
          %212 = vsyncadd [#allocation11], %s211
          %s213 = sshll.u32 [#allocation10], 4
          %s214 = int_to_ptr.vmem [resolvable:$true] %s213
          %219 = dma.hbm_to_vmem [thread:$0]  %s3, 8192, %s214, [#allocation11], 512, 512, 32
        $region16: #{sqa_lstm_forward.2} parent=11 // pred_fallthru
          _
      $region12: #{sqa_lstm_forward.2} parent=5 // pred_fallthru
        _
      %p220 = scmp.lt.s32.totalorder %s25, 4
      // Predicated region
      $region17: #{sqa_lstm_forward.2} parent=5 // pred_check
        %p221 = pneg %p220
      $region18: #{sqa_lstm_forward.2} parent=5 // pred_check_branch
        %223 = sbr.rel (%p221) target = $region20
      $region19: #{sqa_lstm_forward.2} parent=5 // pred_region
        // Predicated region
        $region21: #{sqa_lstm_forward.2} parent=19 // pred_check
          %p224 = pneg %p59
        $region22: #{sqa_lstm_forward.2} parent=19 // pred_check_branch
          %226 = sbr.rel (%p224) target = $region24
        $region23: #{sqa_lstm_forward.2} parent=19 // pred_region
          %s227 = sand.u32 %s49, 1
          %s228 = scalar_lea.sflag [#allocation5], %s227
          %s229 = sand.u32 %s49, 1
          %s230 = smul.addr %s229, 256
          %s231 = scalar_lea.vmem [#allocation4], %s230
          %s232 = smul.u32 8, %s33
          %s234 = ssub.s32 4096, 4096
          %235 = vsyncadd %s228, %s234
          %s236 = smul.addr %s32, 4
          %s237 = smul.addr %s232, 8
          %s238 = sadd.s32 %s236, %s237
          %s239 = smul.addr %s238, 128
          %s240 = scalar_lea.hbm %s0, %s239
          %s241 = sshll.u32 %s231, 4
          %s242 = int_to_ptr.vmem [resolvable:$true] %s241
          %247 = dma.hbm_to_vmem [thread:$0]  %s240, 4096, %s242, %s228, 1024, 512, 32
        $region24: #{sqa_lstm_forward.2} parent=19 // pred_fallthru
          _
        // Predicated region
        $region25: #{sqa_lstm_forward.2} parent=19 // pred_check
          %p248 = pneg %p85
        $region26: #{sqa_lstm_forward.2} parent=19 // pred_check_branch
          %250 = sbr.rel (%p248) target = $region28
        $region27: #{sqa_lstm_forward.2} parent=19 // pred_region
          %s251 = sand.u32 %s25, 1
          %s252 = scalar_lea.sflag [#allocation8], %s251
          %s253 = sand.u32 %s75, 1
          %s254 = smul.addr %s253, 8
          %s255 = scalar_lea.vmem [#allocation7], %s254
          %s257 = ssub.s32 128, 128
          %258 = vsyncadd %s252, %s257
          %s259 = smul.addr %s32, 128
          %s260 = scalar_lea.hbm %s1, %s259
          %s262 = sshll.u32 %s255, 4
          %s263 = int_to_ptr.vmem [resolvable:$true] %s262
          %265 = dma.hbm_to_vmem [thread:$0]  %s260, 128, %s263, %s252
        $region28: #{sqa_lstm_forward.2} parent=19 // pred_fallthru
          _
        // Predicated region
        $region29: #{sqa_lstm_forward.2} parent=19 // pred_check
          %p266 = pneg %p111
        $region30: #{sqa_lstm_forward.2} parent=19 // pred_check_branch
          %268 = sbr.rel (%p266) target = $region32
        $region31: #{sqa_lstm_forward.2} parent=19 // pred_region
          %s269 = sand.u32 %s25, 1
          %s270 = scalar_lea.sflag [#allocation8], %s269
          %s271 = sand.u32 %s101, 1
          %s272 = smul.addr %s271, 8
          %s273 = scalar_lea.vmem [#allocation9], %s272
          %s275 = ssub.s32 128, 128
          %276 = vsyncadd %s270, %s275
          %s277 = smul.addr %s32, 128
          %s278 = scalar_lea.hbm %s2, %s277
          %s280 = sshll.u32 %s273, 4
          %s281 = int_to_ptr.vmem [resolvable:$true] %s280
          %283 = dma.hbm_to_vmem [thread:$0]  %s278, 128, %s281, %s270
        $region32: #{sqa_lstm_forward.2} parent=19 // pred_fallthru
          _
      $region20: #{sqa_lstm_forward.2} parent=5 // pred_fallthru
        _
      %p284 = scmp.le.s32.totalorder 1, %s25
      %p285 = scmp.lt.s32.totalorder %s25, 5
      %p286 = pnand %p284, %p285
      %p287 = pneg %p286
      // Predicated region
      $region33: #{sqa_lstm_forward.2} parent=5 // pred_check
        _
      $region34: #{sqa_lstm_forward.2} parent=5 // pred_check_branch
        %289 = sbr.rel (%p286) target = $region36
      $region35: #{sqa_lstm_forward.2} parent=5 // pred_region
        %s290 = ssub.s32 %s25, 1
        %s291 = sand.u32 %s52, 1
        %s292 = scalar_lea.sflag [#allocation5], %s291
        %s293 = sand.u32 %s52, 1
        %s294 = smul.addr %s293, 256
        %s295 = scalar_lea.vmem [#allocation4], %s294
        // Predicated region
        $region37: #{sqa_lstm_forward.2} parent=35 // pred_check
          %p296 = pneg %p65
        $region38: #{sqa_lstm_forward.2} parent=35 // pred_check_branch
          %298 = sbr.rel (%p296) target = $region40
        $region39: #{sqa_lstm_forward.2} parent=35 // pred_region
          %299 = dma.done %s292, 4096
        $region40: #{sqa_lstm_forward.2} parent=35 // pred_fallthru
          _
        %s300 = sand.u32 %s30, 1
        %s301 = scalar_lea.sflag [#allocation8], %s300
        %s302 = sand.u32 %s78, 1
        %s303 = smul.addr %s302, 8
        %s304 = scalar_lea.vmem [#allocation7], %s303
        // Predicated region
        $region41: #{sqa_lstm_forward.2} parent=35 // pred_check
          %p305 = pneg %p91
        $region42: #{sqa_lstm_forward.2} parent=35 // pred_check_branch
          %307 = sbr.rel (%p305) target = $region44
        $region43: #{sqa_lstm_forward.2} parent=35 // pred_region
          %308 = dma.done %s301, 128
        $region44: #{sqa_lstm_forward.2} parent=35 // pred_fallthru
          _
        %s309 = sand.u32 %s30, 1
        %s310 = scalar_lea.sflag [#allocation8], %s309
        %s311 = sand.u32 %s104, 1
        %s312 = smul.addr %s311, 8
        %s313 = scalar_lea.vmem [#allocation9], %s312
        // Predicated region
        $region45: #{sqa_lstm_forward.2} parent=35 // pred_check
          %p314 = pneg %p117
        $region46: #{sqa_lstm_forward.2} parent=35 // pred_check_branch
          %316 = sbr.rel (%p314) target = $region48
        $region47: #{sqa_lstm_forward.2} parent=35 // pred_region
          %317 = dma.done %s310, 128
        $region48: #{sqa_lstm_forward.2} parent=35 // pred_fallthru
          _
        // Predicated region
        $region49: #{sqa_lstm_forward.2} parent=35 // pred_check
          %p318 = pneg %p138
        $region50: #{sqa_lstm_forward.2} parent=35 // pred_check_branch
          %320 = sbr.rel (%p318) target = $region52
        $region51: #{sqa_lstm_forward.2} parent=35 // pred_region
          %321 = dma.done [#allocation11], 8192
        $region52: #{sqa_lstm_forward.2} parent=35 // pred_fallthru
          _
        %s322 = sand.u32 %s52, 1
        %s323 = scalar_lea.sflag [#allocation5], %s322
        %s324 = sand.u32 %s52, 1
        %s325 = smul.addr %s324, 256
        %s326 = scalar_lea.vmem [#allocation4], %s325
        %p327 = pneg %p65
        %p328 = pneg %p62
        %s329 = sand.u32 %s30, 1
        %s330 = scalar_lea.sflag [#allocation8], %s329
        %s331 = sand.u32 %s78, 1
        %s332 = smul.addr %s331, 8
        %s333 = scalar_lea.vmem [#allocation7], %s332
        %p334 = pneg %p91
        %p335 = pneg %p88
        %s336 = sand.u32 %s30, 1
        %s337 = scalar_lea.sflag [#allocation8], %s336
        %s338 = sand.u32 %s104, 1
        %s339 = smul.addr %s338, 8
        %s340 = scalar_lea.vmem [#allocation9], %s339
        %p341 = pneg %p117
        %p342 = pneg %p114
        %p343 = pneg %p138
        %p344 = pneg %p135
        %p345 = pneg %p166
        %p346 = pneg %p163
        %s347 = sand.u32 %s153, 1
        %s348 = scalar_lea.sflag [#allocation6], %s347
        %s349 = sand.u32 %s153, 1
        %s350 = smul.addr %s349, 64
        %s351 = scalar_lea.vmem [#allocation12], %s350
        %p352 = pneg %p192
        %p353 = pneg %p189
        %s354 = sand.u32 %s179, 1
        %s355 = scalar_lea.sflag [#allocation14], %s354
        %s356 = sand.u32 %s179, 1
        %s357 = smul.addr %s356, 8
        %s358 = scalar_lea.vmem [#allocation13], %s357
        %s359 = smul.u32 8, %s35
        %s360 = smul.u32 8, %s35
        %p361 = scmp.eq.s32.totalorder %s35, 0
        // Predicated region
        $region53: #{sqa_lstm_forward.2} parent=35 // pred_check
          %p362 = pneg %p361
        $region54: #{sqa_lstm_forward.2} parent=35 // pred_check_branch
          %364 = sbr.rel (%p362) target = $region56
        $region55: #{sqa_lstm_forward.2} parent=35 // pred_region
          %v365 = vld [vmem:[%s304] sm:$0xff]
          %366 = vst [vmem:[#allocation2] sm:$0xff] %v365
          %v367 = vld [vmem:[%s313] sm:$0xff]
          %368 = vst [vmem:[#allocation3] sm:$0xff] %v367
        $region56: #{sqa_lstm_forward.2} parent=35 // pred_fallthru
          _
        %v369 = vld [vmem:[#allocation10] sm:$0xff]
        %v370 = vld [vmem:[#allocation10 + $0x8] sm:$0xff]
        %v371 = vld [vmem:[#allocation10 + $0x10] sm:$0xff]
        %v372 = vld [vmem:[#allocation10 + $0x18] sm:$0xff]
        %v373 = vld [vmem:[#allocation10 + $0x20] sm:$0xff]
        %v374 = vld [vmem:[#allocation10 + $0x28] sm:$0xff]
        %v375 = vld [vmem:[#allocation10 + $0x30] sm:$0xff]
        %v376 = vld [vmem:[#allocation10 + $0x38] sm:$0xff]
        %v377 = vld [vmem:[#allocation10 + $0x40] sm:$0xff]
        %v378 = vld [vmem:[#allocation10 + $0x48] sm:$0xff]
        %v379 = vld [vmem:[#allocation10 + $0x50] sm:$0xff]
        %v380 = vld [vmem:[#allocation10 + $0x58] sm:$0xff]
        %v381 = vld [vmem:[#allocation10 + $0x60] sm:$0xff]
        %v382 = vld [vmem:[#allocation10 + $0x68] sm:$0xff]
        %v383 = vld [vmem:[#allocation10 + $0x70] sm:$0xff]
        %v384 = vld [vmem:[#allocation10 + $0x78] sm:$0xff]
        %v385 = vld [vmem:[#allocation10 + $0x80] sm:$0xff]
        %v386 = vld [vmem:[#allocation10 + $0x88] sm:$0xff]
        %v387 = vld [vmem:[#allocation10 + $0x90] sm:$0xff]
        %v388 = vld [vmem:[#allocation10 + $0x98] sm:$0xff]
        %v389 = vld [vmem:[#allocation10 + $0xa0] sm:$0xff]
        %v390 = vld [vmem:[#allocation10 + $0xa8] sm:$0xff]
        %v391 = vld [vmem:[#allocation10 + $0xb0] sm:$0xff]
        %v392 = vld [vmem:[#allocation10 + $0xb8] sm:$0xff]
        %v393 = vld [vmem:[#allocation10 + $0xc0] sm:$0xff]
        %v394 = vld [vmem:[#allocation10 + $0xc8] sm:$0xff]
        %v395 = vld [vmem:[#allocation10 + $0xd0] sm:$0xff]
        %v396 = vld [vmem:[#allocation10 + $0xd8] sm:$0xff]
        %v397 = vld [vmem:[#allocation10 + $0xe0] sm:$0xff]
        %v398 = vld [vmem:[#allocation10 + $0xe8] sm:$0xff]
        %v399 = vld [vmem:[#allocation10 + $0xf0] sm:$0xff]
        %v400 = vld [vmem:[#allocation10 + $0xf8] sm:$0xff]
        %v401 = vld [vmem:[#allocation10 + $0x100] sm:$0xff]
        %v402 = vld [vmem:[#allocation10 + $0x108] sm:$0xff]
        %v403 = vld [vmem:[#allocation10 + $0x110] sm:$0xff]
        %v404 = vld [vmem:[#allocation10 + $0x118] sm:$0xff]
        %v405 = vld [vmem:[#allocation10 + $0x120] sm:$0xff]
        %v406 = vld [vmem:[#allocation10 + $0x128] sm:$0xff]
        %v407 = vld [vmem:[#allocation10 + $0x130] sm:$0xff]
        %v408 = vld [vmem:[#allocation10 + $0x138] sm:$0xff]
        %v409 = vld [vmem:[#allocation10 + $0x140] sm:$0xff]
        %v410 = vld [vmem:[#allocation10 + $0x148] sm:$0xff]
        %v411 = vld [vmem:[#allocation10 + $0x150] sm:$0xff]
        %v412 = vld [vmem:[#allocation10 + $0x158] sm:$0xff]
        %v413 = vld [vmem:[#allocation10 + $0x160] sm:$0xff]
        %v414 = vld [vmem:[#allocation10 + $0x168] sm:$0xff]
        %v415 = vld [vmem:[#allocation10 + $0x170] sm:$0xff]
        %v416 = vld [vmem:[#allocation10 + $0x178] sm:$0xff]
        %v417 = vld [vmem:[#allocation10 + $0x180] sm:$0xff]
        %v418 = vld [vmem:[#allocation10 + $0x188] sm:$0xff]
        %v419 = vld [vmem:[#allocation10 + $0x190] sm:$0xff]
        %v420 = vld [vmem:[#allocation10 + $0x198] sm:$0xff]
        %v421 = vld [vmem:[#allocation10 + $0x1a0] sm:$0xff]
        %v422 = vld [vmem:[#allocation10 + $0x1a8] sm:$0xff]
        %v423 = vld [vmem:[#allocation10 + $0x1b0] sm:$0xff]
        %v424 = vld [vmem:[#allocation10 + $0x1b8] sm:$0xff]
        %v425 = vld [vmem:[#allocation10 + $0x1c0] sm:$0xff]
        %v426 = vld [vmem:[#allocation10 + $0x1c8] sm:$0xff]
        %v427 = vld [vmem:[#allocation10 + $0x1d0] sm:$0xff]
        %v428 = vld [vmem:[#allocation10 + $0x1d8] sm:$0xff]
        %v429 = vld [vmem:[#allocation10 + $0x1e0] sm:$0xff]
        %v430 = vld [vmem:[#allocation10 + $0x1e8] sm:$0xff]
        %v431 = vld [vmem:[#allocation10 + $0x1f0] sm:$0xff]
        %v432 = vld [vmem:[#allocation10 + $0x1f8] sm:$0xff]
        %v433 = vld [vmem:[#allocation2] sm:$0xff]
        %v434 = vld [vmem:[#allocation3] sm:$0xff]
        %v435 = vld [vmem:[%s295] sm:$0xff]
        %v436 = vld [vmem:[%s295 + $0x8] sm:$0xff]
        %v437 = vld [vmem:[%s295 + $0x10] sm:$0xff]
        %v438 = vld [vmem:[%s295 + $0x18] sm:$0xff]
        %439 = vmatprep.subr.mxu0 %v370
        %440 = vmatpush1.msra.mxu0 %v369
        %441 = vmatprep.subr.mxu0 %v374
        %442 = vmatpush1.msra.mxu0 %v373
        %443 = vmatprep.subr.mxu0 %v378
        %444 = vmatpush1.msra.mxu0 %v377
        %445 = vmatprep.subr.mxu0 %v382
        %446 = vmatpush1.msra.mxu0 %v381
        %447 = vmatprep.subr.mxu0 %v386
        %448 = vmatpush1.msra.mxu0 %v385
        %449 = vmatprep.subr.mxu0 %v390
        %450 = vmatpush1.msra.mxu0 %v389
        %451 = vmatprep.subr.mxu0 %v394
        %452 = vmatpush1.msra.mxu0 %v393
        %453 = vmatprep.subr.mxu0 %v398
        %454 = vmatpush1.msra.mxu0 %v397
        %455 = vmatprep.subr.mxu0 %v402
        %456 = vmatpush1.msra.mxu0 %v401
        %457 = vmatprep.subr.mxu0 %v406
        %458 = vmatpush1.msra.mxu0 %v405
        %459 = vmatprep.subr.mxu0 %v410
        %460 = vmatpush1.msra.mxu0 %v409
        %461 = vmatprep.subr.mxu0 %v414
        %462 = vmatpush1.msra.mxu0 %v413
        %463 = vmatprep.subr.mxu0 %v418
        %464 = vmatpush1.msra.mxu0 %v417
        %465 = vmatprep.subr.mxu0 %v422
        %466 = vmatpush1.msra.mxu0 %v421
        %467 = vmatprep.subr.mxu0 %v426
        %468 = vmatpush1.msra.mxu0 %v425
        %469 = vmatprep.subr.mxu0 %v430
        %470 = vmatpush1.msra.mxu0 %v429
        %471 = vmatprep.subr.mxu0 0.0
        %472 = vmatpush1.msra.mxu0 0.0
        %473 = vmatprep.subr.mxu0 0.0
        %474 = vmatpush1.msra.mxu0 0.0
        %475 = vmatprep.subr.mxu0 0.0
        %476 = vmatpush1.msra.mxu0 0.0
        %477 = vmatprep.subr.mxu0 0.0
        %478 = vmatpush1.msra.mxu0 0.0
        %479 = vmatprep.subr.mxu0 0.0
        %480 = vmatpush1.msra.mxu0 0.0
        %481 = vmatprep.subr.mxu0 0.0
        %482 = vmatpush1.msra.mxu0 0.0
        %483 = vmatprep.subr.mxu0 0.0
        %484 = vmatpush1.msra.mxu0 0.0
        %485 = vmatprep.subr.mxu0 0.0
        %486 = vmatpush1.msra.mxu0 0.0
        %487 = vmatprep.subr.mxu0 0.0
        %488 = vmatpush1.msra.mxu0 0.0
        %489 = vmatprep.subr.mxu0 0.0
        %490 = vmatpush1.msra.mxu0 0.0
        %491 = vmatprep.subr.mxu0 0.0
        %492 = vmatpush1.msra.mxu0 0.0
        %493 = vmatprep.subr.mxu0 0.0
        %494 = vmatpush1.msra.mxu0 0.0
        %495 = vmatprep.subr.mxu0 0.0
        %496 = vmatpush1.msra.mxu0 0.0
        %497 = vmatprep.subr.mxu0 0.0
        %498 = vmatpush1.msra.mxu0 0.0
        %499 = vmatprep.subr.mxu0 0.0
        %500 = vmatpush1.msra.mxu0 0.0
        %501 = vmatprep.subr.mxu0 0.0
        %502 = vmatpush1.msra.mxu0 0.0
        %503 = vmatprep.mubr.f32.mxu0 0.0
        %504 = vmatmul.mubr.f32.gmra.mrb[0].mxu0 %v433
        %v505 = vpop.f32.mrb[0].mxu0
        %v506 = vadd.f32 0.0, %v505
        %v507 = vpop.f32.mrb[0].mxu0
        %v508 = vadd.f32 0.0, %v507
        %509 = vdwg.mxu0
        %510 = vmatprep.subr.mxu0 %v372
        %511 = vmatpush1.msra.mxu0 %v371
        %512 = vmatprep.subr.mxu0 %v376
        %513 = vmatpush1.msra.mxu0 %v375
        %514 = vmatprep.subr.mxu0 %v380
        %515 = vmatpush1.msra.mxu0 %v379
        %516 = vmatprep.subr.mxu0 %v384
        %517 = vmatpush1.msra.mxu0 %v383
        %518 = vmatprep.subr.mxu0 %v388
        %519 = vmatpush1.msra.mxu0 %v387
        %520 = vmatprep.subr.mxu0 %v392
        %521 = vmatpush1.msra.mxu0 %v391
        %522 = vmatprep.subr.mxu0 %v396
        %523 = vmatpush1.msra.mxu0 %v395
        %524 = vmatprep.subr.mxu0 %v400
        %525 = vmatpush1.msra.mxu0 %v399
        %526 = vmatprep.subr.mxu0 %v404
        %527 = vmatpush1.msra.mxu0 %v403
        %528 = vmatprep.subr.mxu0 %v408
        %529 = vmatpush1.msra.mxu0 %v407
        %530 = vmatprep.subr.mxu0 %v412
        %531 = vmatpush1.msra.mxu0 %v411
        %532 = vmatprep.subr.mxu0 %v416
        %533 = vmatpush1.msra.mxu0 %v415
        %534 = vmatprep.subr.mxu0 %v420
        %535 = vmatpush1.msra.mxu0 %v419
        %536 = vmatprep.subr.mxu0 %v424
        %537 = vmatpush1.msra.mxu0 %v423
        %538 = vmatprep.subr.mxu0 %v428
        %539 = vmatpush1.msra.mxu0 %v427
        %540 = vmatprep.subr.mxu0 %v432
        %541 = vmatpush1.msra.mxu0 %v431
        %542 = vmatprep.subr.mxu0 0.0
        %543 = vmatpush1.msra.mxu0 0.0
        %544 = vmatprep.subr.mxu0 0.0
        %545 = vmatpush1.msra.mxu0 0.0
        %546 = vmatprep.subr.mxu0 0.0
        %547 = vmatpush1.msra.mxu0 0.0
        %548 = vmatprep.subr.mxu0 0.0
        %549 = vmatpush1.msra.mxu0 0.0
        %550 = vmatprep.subr.mxu0 0.0
        %551 = vmatpush1.msra.mxu0 0.0
        %552 = vmatprep.subr.mxu0 0.0
        %553 = vmatpush1.msra.mxu0 0.0
        %554 = vmatprep.subr.mxu0 0.0
        %555 = vmatpush1.msra.mxu0 0.0
        %556 = vmatprep.subr.mxu0 0.0
        %557 = vmatpush1.msra.mxu0 0.0
        %558 = vmatprep.subr.mxu0 0.0
        %559 = vmatpush1.msra.mxu0 0.0
        %560 = vmatprep.subr.mxu0 0.0
        %561 = vmatpush1.msra.mxu0 0.0
        %562 = vmatprep.subr.mxu0 0.0
        %563 = vmatpush1.msra.mxu0 0.0
        %564 = vmatprep.subr.mxu0 0.0
        %565 = vmatpush1.msra.mxu0 0.0
        %566 = vmatprep.subr.mxu0 0.0
        %567 = vmatpush1.msra.mxu0 0.0
        %568 = vmatprep.subr.mxu0 0.0
        %569 = vmatpush1.msra.mxu0 0.0
        %570 = vmatprep.subr.mxu0 0.0
        %571 = vmatpush1.msra.mxu0 0.0
        %572 = vmatprep.subr.mxu0 0.0
        %573 = vmatpush1.msra.mxu0 0.0
        %574 = vmatprep.mubr.f32.mxu0 0.0
        %575 = vmatmul.mubr.f32.gmra.mrb[0].mxu0 %v433
        %v576 = vpop.f32.mrb[0].mxu0
        %v577 = vadd.f32 0.0, %v576
        %v578 = vpop.f32.mrb[0].mxu0
        %v579 = vadd.f32 0.0, %v578
        %580 = vdwg.mxu0
        %v581 = vadd.f32 %v435, %v506
        %v582 = vadd.f32 %v436, %v508
        %v583 = vadd.f32 %v437, %v577
        %v584 = vadd.f32 %v438, %v579
        %v585 = vmul.f32 %v582, 0.5
        %v586 = vtanh.pop %v585
        %v587 = vmul.f32 %v586, 0.5
        %v588 = vadd.f32 %v587, 0.5
        %v589 = vmul.f32 %v588, %v434
        %v590 = vmul.f32 %v581, 0.5
        %v591 = vtanh.pop %v590
        %v592 = vmul.f32 %v591, 0.5
        %v593 = vadd.f32 %v592, 0.5
        %v594 = vtanh.pop %v583
        %v595 = vmul.f32 %v593, %v594
        %v596 = vadd.f32 %v589, %v595
        %v597 = vmul.f32 %v584, 0.5
        %v598 = vtanh.pop %v597
        %v599 = vmul.f32 %v598, 0.5
        %v600 = vadd.f32 %v599, 0.5
        %v601 = vtanh.pop %v596
        %v602 = vmul.f32 %v600, %v601
        %603 = vst [vmem:[%s351] sm:$0xff] %v602
        %s604 = scalar_lea.vmem %s295, 32 [#allocation4]
        %v605 = vld [vmem:[%s604] sm:$0xff]
        %v606 = vld [vmem:[%s604 + $0x8] sm:$0xff]
        %v607 = vld [vmem:[%s604 + $0x10] sm:$0xff]
        %v608 = vld [vmem:[%s604 + $0x18] sm:$0xff]
        %609 = vmatprep.subr.mxu0 %v370
        %610 = vmatpush1.msra.mxu0 %v369
        %611 = vmatprep.subr.mxu0 %v374
        %612 = vmatpush1.msra.mxu0 %v373
        %613 = vmatprep.subr.mxu0 %v378
        %614 = vmatpush1.msra.mxu0 %v377
        %615 = vmatprep.subr.mxu0 %v382
        %616 = vmatpush1.msra.mxu0 %v381
        %617 = vmatprep.subr.mxu0 %v386
        %618 = vmatpush1.msra.mxu0 %v385
        %619 = vmatprep.subr.mxu0 %v390
        %620 = vmatpush1.msra.mxu0 %v389
        %621 = vmatprep.subr.mxu0 %v394
        %622 = vmatpush1.msra.mxu0 %v393
        %623 = vmatprep.subr.mxu0 %v398
        %624 = vmatpush1.msra.mxu0 %v397
        %625 = vmatprep.subr.mxu0 %v402
        %626 = vmatpush1.msra.mxu0 %v401
        %627 = vmatprep.subr.mxu0 %v406
        %628 = vmatpush1.msra.mxu0 %v405
        %629 = vmatprep.subr.mxu0 %v410
        %630 = vmatpush1.msra.mxu0 %v409
        %631 = vmatprep.subr.mxu0 %v414
        %632 = vmatpush1.msra.mxu0 %v413
        %633 = vmatprep.subr.mxu0 %v418
        %634 = vmatpush1.msra.mxu0 %v417
        %635 = vmatprep.subr.mxu0 %v422
        %636 = vmatpush1.msra.mxu0 %v421
        %637 = vmatprep.subr.mxu0 %v426
        %638 = vmatpush1.msra.mxu0 %v425
        %639 = vmatprep.subr.mxu0 %v430
        %640 = vmatpush1.msra.mxu0 %v429
        %641 = vmatprep.subr.mxu0 0.0
        %642 = vmatpush1.msra.mxu0 0.0
        %643 = vmatprep.subr.mxu0 0.0
        %644 = vmatpush1.msra.mxu0 0.0
        %645 = vmatprep.subr.mxu0 0.0
        %646 = vmatpush1.msra.mxu0 0.0
        %647 = vmatprep.subr.mxu0 0.0
        %648 = vmatpush1.msra.mxu0 0.0
        %649 = vmatprep.subr.mxu0 0.0
        %650 = vmatpush1.msra.mxu0 0.0
        %651 = vmatprep.subr.mxu0 0.0
        %652 = vmatpush1.msra.mxu0 0.0
        %653 = vmatprep.subr.mxu0 0.0
        %654 = vmatpush1.msra.mxu0 0.0
        %655 = vmatprep.subr.mxu0 0.0
        %656 = vmatpush1.msra.mxu0 0.0
        %657 = vmatprep.subr.mxu0 0.0
        %658 = vmatpush1.msra.mxu0 0.0
        %659 = vmatprep.subr.mxu0 0.0
        %660 = vmatpush1.msra.mxu0 0.0
        %661 = vmatprep.subr.mxu0 0.0
        %662 = vmatpush1.msra.mxu0 0.0
        %663 = vmatprep.subr.mxu0 0.0
        %664 = vmatpush1.msra.mxu0 0.0
        %665 = vmatprep.subr.mxu0 0.0
        %666 = vmatpush1.msra.mxu0 0.0
        %667 = vmatprep.subr.mxu0 0.0
        %668 = vmatpush1.msra.mxu0 0.0
        %669 = vmatprep.subr.mxu0 0.0
        %670 = vmatpush1.msra.mxu0 0.0
        %671 = vmatprep.subr.mxu0 0.0
        %672 = vmatpush1.msra.mxu0 0.0
        %673 = vmatprep.mubr.f32.mxu0 0.0
        %674 = vmatmul.mubr.f32.gmra.mrb[0].mxu0 %v602
        %v675 = vpop.f32.mrb[0].mxu0
        %v676 = vadd.f32 0.0, %v675
        %v677 = vpop.f32.mrb[0].mxu0
        %v678 = vadd.f32 0.0, %v677
        %679 = vdwg.mxu0
        %680 = vmatprep.subr.mxu0 %v372
        %681 = vmatpush1.msra.mxu0 %v371
        %682 = vmatprep.subr.mxu0 %v376
        %683 = vmatpush1.msra.mxu0 %v375
        %684 = vmatprep.subr.mxu0 %v380
        %685 = vmatpush1.msra.mxu0 %v379
        %686 = vmatprep.subr.mxu0 %v384
        %687 = vmatpush1.msra.mxu0 %v383
        %688 = vmatprep.subr.mxu0 %v388
        %689 = vmatpush1.msra.mxu0 %v387
        %690 = vmatprep.subr.mxu0 %v392
        %691 = vmatpush1.msra.mxu0 %v391
        %692 = vmatprep.subr.mxu0 %v396
        %693 = vmatpush1.msra.mxu0 %v395
        %694 = vmatprep.subr.mxu0 %v400
        %695 = vmatpush1.msra.mxu0 %v399
        %696 = vmatprep.subr.mxu0 %v404
        %697 = vmatpush1.msra.mxu0 %v403
        %698 = vmatprep.subr.mxu0 %v408
        %699 = vmatpush1.msra.mxu0 %v407
        %700 = vmatprep.subr.mxu0 %v412
        %701 = vmatpush1.msra.mxu0 %v411
        %702 = vmatprep.subr.mxu0 %v416
        %703 = vmatpush1.msra.mxu0 %v415
        %704 = vmatprep.subr.mxu0 %v420
        %705 = vmatpush1.msra.mxu0 %v419
        %706 = vmatprep.subr.mxu0 %v424
        %707 = vmatpush1.msra.mxu0 %v423
        %708 = vmatprep.subr.mxu0 %v428
        %709 = vmatpush1.msra.mxu0 %v427
        %710 = vmatprep.subr.mxu0 %v432
        %711 = vmatpush1.msra.mxu0 %v431
        %712 = vmatprep.subr.mxu0 0.0
        %713 = vmatpush1.msra.mxu0 0.0
        %714 = vmatprep.subr.mxu0 0.0
        %715 = vmatpush1.msra.mxu0 0.0
        %716 = vmatprep.subr.mxu0 0.0
        %717 = vmatpush1.msra.mxu0 0.0
        %718 = vmatprep.subr.mxu0 0.0
        %719 = vmatpush1.msra.mxu0 0.0
        %720 = vmatprep.subr.mxu0 0.0
        %721 = vmatpush1.msra.mxu0 0.0
        %722 = vmatprep.subr.mxu0 0.0
        %723 = vmatpush1.msra.mxu0 0.0
        %724 = vmatprep.subr.mxu0 0.0
        %725 = vmatpush1.msra.mxu0 0.0
        %726 = vmatprep.subr.mxu0 0.0
        %727 = vmatpush1.msra.mxu0 0.0
        %728 = vmatprep.subr.mxu0 0.0
        %729 = vmatpush1.msra.mxu0 0.0
        %730 = vmatprep.subr.mxu0 0.0
        %731 = vmatpush1.msra.mxu0 0.0
        %732 = vmatprep.subr.mxu0 0.0
        %733 = vmatpush1.msra.mxu0 0.0
        %734 = vmatprep.subr.mxu0 0.0
        %735 = vmatpush1.msra.mxu0 0.0
        %736 = vmatprep.subr.mxu0 0.0
        %737 = vmatpush1.msra.mxu0 0.0
        %738 = vmatprep.subr.mxu0 0.0
        %739 = vmatpush1.msra.mxu0 0.0
        %740 = vmatprep.subr.mxu0 0.0
        %741 = vmatpush1.msra.mxu0 0.0
        %742 = vmatprep.subr.mxu0 0.0
        %743 = vmatpush1.msra.mxu0 0.0
        %744 = vmatprep.mubr.f32.mxu0 0.0
        %745 = vmatmul.mubr.f32.gmra.mrb[0].mxu0 %v602
        %v746 = vpop.f32.mrb[0].mxu0
        %v747 = vadd.f32 0.0, %v746
        %v748 = vpop.f32.mrb[0].mxu0
        %v749 = vadd.f32 0.0, %v748
        %750 = vdwg.mxu0
        %v751 = vadd.f32 %v605, %v676
        %v752 = vadd.f32 %v606, %v678
        %v753 = vadd.f32 %v607, %v747
        %v754 = vadd.f32 %v608, %v749
        %v755 = vmul.f32 %v752, 0.5
        %v756 = vtanh.pop %v755
        %v757 = vmul.f32 %v756, 0.5
        %v758 = vadd.f32 %v757, 0.5
        %v759 = vmul.f32 %v758, %v596
        %v760 = vmul.f32 %v751, 0.5
        %v761 = vtanh.pop %v760
        %v762 = vmul.f32 %v761, 0.5
        %v763 = vadd.f32 %v762, 0.5
        %v764 = vtanh.pop %v753
        %v765 = vmul.f32 %v763, %v764
        %v766 = vadd.f32 %v759, %v765
        %v767 = vmul.f32 %v754, 0.5
        %v768 = vtanh.pop %v767
        %v769 = vmul.f32 %v768, 0.5
        %v770 = vadd.f32 %v769, 0.5
        %v771 = vtanh.pop %v766
        %v772 = vmul.f32 %v770, %v771
        %s773 = scalar_lea.vmem %s351, 8 [#allocation12]
        %774 = vst [vmem:[%s773] sm:$0xff] %v772
        %s775 = scalar_lea.vmem %s295, 64 [#allocation4]
        %v776 = vld [vmem:[%s775] sm:$0xff]
        %v777 = vld [vmem:[%s775 + $0x8] sm:$0xff]
        %v778 = vld [vmem:[%s775 + $0x10] sm:$0xff]
        %v779 = vld [vmem:[%s775 + $0x18] sm:$0xff]
        %780 = vmatprep.subr.mxu0 %v370
        %781 = vmatpush1.msra.mxu0 %v369
        %782 = vmatprep.subr.mxu0 %v374
        %783 = vmatpush1.msra.mxu0 %v373
        %784 = vmatprep.subr.mxu0 %v378
        %785 = vmatpush1.msra.mxu0 %v377
        %786 = vmatprep.subr.mxu0 %v382
        %787 = vmatpush1.msra.mxu0 %v381
        %788 = vmatprep.subr.mxu0 %v386
        %789 = vmatpush1.msra.mxu0 %v385
        %790 = vmatprep.subr.mxu0 %v390
        %791 = vmatpush1.msra.mxu0 %v389
        %792 = vmatprep.subr.mxu0 %v394
        %793 = vmatpush1.msra.mxu0 %v393
        %794 = vmatprep.subr.mxu0 %v398
        %795 = vmatpush1.msra.mxu0 %v397
        %796 = vmatprep.subr.mxu0 %v402
        %797 = vmatpush1.msra.mxu0 %v401
        %798 = vmatprep.subr.mxu0 %v406
        %799 = vmatpush1.msra.mxu0 %v405
        %800 = vmatprep.subr.mxu0 %v410
        %801 = vmatpush1.msra.mxu0 %v409
        %802 = vmatprep.subr.mxu0 %v414
        %803 = vmatpush1.msra.mxu0 %v413
        %804 = vmatprep.subr.mxu0 %v418
        %805 = vmatpush1.msra.mxu0 %v417
        %806 = vmatprep.subr.mxu0 %v422
        %807 = vmatpush1.msra.mxu0 %v421
        %808 = vmatprep.subr.mxu0 %v426
        %809 = vmatpush1.msra.mxu0 %v425
        %810 = vmatprep.subr.mxu0 %v430
        %811 = vmatpush1.msra.mxu0 %v429
        %812 = vmatprep.subr.mxu0 0.0
        %813 = vmatpush1.msra.mxu0 0.0
        %814 = vmatprep.subr.mxu0 0.0
        %815 = vmatpush1.msra.mxu0 0.0
        %816 = vmatprep.subr.mxu0 0.0
        %817 = vmatpush1.msra.mxu0 0.0
        %818 = vmatprep.subr.mxu0 0.0
        %819 = vmatpush1.msra.mxu0 0.0
        %820 = vmatprep.subr.mxu0 0.0
        %821 = vmatpush1.msra.mxu0 0.0
        %822 = vmatprep.subr.mxu0 0.0
        %823 = vmatpush1.msra.mxu0 0.0
        %824 = vmatprep.subr.mxu0 0.0
        %825 = vmatpush1.msra.mxu0 0.0
        %826 = vmatprep.subr.mxu0 0.0
        %827 = vmatpush1.msra.mxu0 0.0
        %828 = vmatprep.subr.mxu0 0.0
        %829 = vmatpush1.msra.mxu0 0.0
        %830 = vmatprep.subr.mxu0 0.0
        %831 = vmatpush1.msra.mxu0 0.0
        %832 = vmatprep.subr.mxu0 0.0
        %833 = vmatpush1.msra.mxu0 0.0
        %834 = vmatprep.subr.mxu0 0.0
        %835 = vmatpush1.msra.mxu0 0.0
        %836 = vmatprep.subr.mxu0 0.0
        %837 = vmatpush1.msra.mxu0 0.0
        %838 = vmatprep.subr.mxu0 0.0
        %839 = vmatpush1.msra.mxu0 0.0
        %840 = vmatprep.subr.mxu0 0.0
        %841 = vmatpush1.msra.mxu0 0.0
        %842 = vmatprep.subr.mxu0 0.0
        %843 = vmatpush1.msra.mxu0 0.0
        %844 = vmatprep.mubr.f32.mxu0 0.0
        %845 = vmatmul.mubr.f32.gmra.mrb[0].mxu0 %v772
        %v846 = vpop.f32.mrb[0].mxu0
        %v847 = vadd.f32 0.0, %v846
        %v848 = vpop.f32.mrb[0].mxu0
        %v849 = vadd.f32 0.0, %v848
        %850 = vdwg.mxu0
        %851 = vmatprep.subr.mxu0 %v372
        %852 = vmatpush1.msra.mxu0 %v371
        %853 = vmatprep.subr.mxu0 %v376
        %854 = vmatpush1.msra.mxu0 %v375
        %855 = vmatprep.subr.mxu0 %v380
        %856 = vmatpush1.msra.mxu0 %v379
        %857 = vmatprep.subr.mxu0 %v384
        %858 = vmatpush1.msra.mxu0 %v383
        %859 = vmatprep.subr.mxu0 %v388
        %860 = vmatpush1.msra.mxu0 %v387
        %861 = vmatprep.subr.mxu0 %v392
        %862 = vmatpush1.msra.mxu0 %v391
        %863 = vmatprep.subr.mxu0 %v396
        %864 = vmatpush1.msra.mxu0 %v395
        %865 = vmatprep.subr.mxu0 %v400
        %866 = vmatpush1.msra.mxu0 %v399
        %867 = vmatprep.subr.mxu0 %v404
        %868 = vmatpush1.msra.mxu0 %v403
        %869 = vmatprep.subr.mxu0 %v408
        %870 = vmatpush1.msra.mxu0 %v407
        %871 = vmatprep.subr.mxu0 %v412
        %872 = vmatpush1.msra.mxu0 %v411
        %873 = vmatprep.subr.mxu0 %v416
        %874 = vmatpush1.msra.mxu0 %v415
        %875 = vmatprep.subr.mxu0 %v420
        %876 = vmatpush1.msra.mxu0 %v419
        %877 = vmatprep.subr.mxu0 %v424
        %878 = vmatpush1.msra.mxu0 %v423
        %879 = vmatprep.subr.mxu0 %v428
        %880 = vmatpush1.msra.mxu0 %v427
        %881 = vmatprep.subr.mxu0 %v432
        %882 = vmatpush1.msra.mxu0 %v431
        %883 = vmatprep.subr.mxu0 0.0
        %884 = vmatpush1.msra.mxu0 0.0
        %885 = vmatprep.subr.mxu0 0.0
        %886 = vmatpush1.msra.mxu0 0.0
        %887 = vmatprep.subr.mxu0 0.0
        %888 = vmatpush1.msra.mxu0 0.0
        %889 = vmatprep.subr.mxu0 0.0
        %890 = vmatpush1.msra.mxu0 0.0
        %891 = vmatprep.subr.mxu0 0.0
        %892 = vmatpush1.msra.mxu0 0.0
        %893 = vmatprep.subr.mxu0 0.0
        %894 = vmatpush1.msra.mxu0 0.0
        %895 = vmatprep.subr.mxu0 0.0
        %896 = vmatpush1.msra.mxu0 0.0
        %897 = vmatprep.subr.mxu0 0.0
        %898 = vmatpush1.msra.mxu0 0.0
        %899 = vmatprep.subr.mxu0 0.0
        %900 = vmatpush1.msra.mxu0 0.0
        %901 = vmatprep.subr.mxu0 0.0
        %902 = vmatpush1.msra.mxu0 0.0
        %903 = vmatprep.subr.mxu0 0.0
        %904 = vmatpush1.msra.mxu0 0.0
        %905 = vmatprep.subr.mxu0 0.0
        %906 = vmatpush1.msra.mxu0 0.0
        %907 = vmatprep.subr.mxu0 0.0
        %908 = vmatpush1.msra.mxu0 0.0
        %909 = vmatprep.subr.mxu0 0.0
        %910 = vmatpush1.msra.mxu0 0.0
        %911 = vmatprep.subr.mxu0 0.0
        %912 = vmatpush1.msra.mxu0 0.0
        %913 = vmatprep.subr.mxu0 0.0
        %914 = vmatpush1.msra.mxu0 0.0
        %915 = vmatprep.mubr.f32.mxu0 0.0
        %916 = vmatmul.mubr.f32.gmra.mrb[0].mxu0 %v772
        %v917 = vpop.f32.mrb[0].mxu0
        %v918 = vadd.f32 0.0, %v917
        %v919 = vpop.f32.mrb[0].mxu0
        %v920 = vadd.f32 0.0, %v919
        %921 = vdwg.mxu0
        %v922 = vadd.f32 %v776, %v847
        %v923 = vadd.f32 %v777, %v849
        %v924 = vadd.f32 %v778, %v918
        %v925 = vadd.f32 %v779, %v920
        %v926 = vmul.f32 %v923, 0.5
        %v927 = vtanh.pop %v926
        %v928 = vmul.f32 %v927, 0.5
        %v929 = vadd.f32 %v928, 0.5
        %v930 = vmul.f32 %v929, %v766
        %v931 = vmul.f32 %v922, 0.5
        %v932 = vtanh.pop %v931
        %v933 = vmul.f32 %v932, 0.5
        %v934 = vadd.f32 %v933, 0.5
        %v935 = vtanh.pop %v924
        %v936 = vmul.f32 %v934, %v935
        %v937 = vadd.f32 %v930, %v936
        %v938 = vmul.f32 %v925, 0.5
        %v939 = vtanh.pop %v938
        %v940 = vmul.f32 %v939, 0.5
        %v941 = vadd.f32 %v940, 0.5
        %v942 = vtanh.pop %v937
        %v943 = vmul.f32 %v941, %v942
        %s944 = scalar_lea.vmem %s351, 16 [#allocation12]
        %945 = vst [vmem:[%s944] sm:$0xff] %v943
        %s946 = scalar_lea.vmem %s295, 96 [#allocation4]
        %v947 = vld [vmem:[%s946] sm:$0xff]
        %v948 = vld [vmem:[%s946 + $0x8] sm:$0xff]
        %v949 = vld [vmem:[%s946 + $0x10] sm:$0xff]
        %v950 = vld [vmem:[%s946 + $0x18] sm:$0xff]
        %951 = vmatprep.subr.mxu0 %v370
        %952 = vmatpush1.msra.mxu0 %v369
        %953 = vmatprep.subr.mxu0 %v374
        %954 = vmatpush1.msra.mxu0 %v373
        %955 = vmatprep.subr.mxu0 %v378
        %956 = vmatpush1.msra.mxu0 %v377
        %957 = vmatprep.subr.mxu0 %v382
        %958 = vmatpush1.msra.mxu0 %v381
        %959 = vmatprep.subr.mxu0 %v386
        %960 = vmatpush1.msra.mxu0 %v385
        %961 = vmatprep.subr.mxu0 %v390
        %962 = vmatpush1.msra.mxu0 %v389
        %963 = vmatprep.subr.mxu0 %v394
        %964 = vmatpush1.msra.mxu0 %v393
        %965 = vmatprep.subr.mxu0 %v398
        %966 = vmatpush1.msra.mxu0 %v397
        %967 = vmatprep.subr.mxu0 %v402
        %968 = vmatpush1.msra.mxu0 %v401
        %969 = vmatprep.subr.mxu0 %v406
        %970 = vmatpush1.msra.mxu0 %v405
        %971 = vmatprep.subr.mxu0 %v410
        %972 = vmatpush1.msra.mxu0 %v409
        %973 = vmatprep.subr.mxu0 %v414
        %974 = vmatpush1.msra.mxu0 %v413
        %975 = vmatprep.subr.mxu0 %v418
        %976 = vmatpush1.msra.mxu0 %v417
        %977 = vmatprep.subr.mxu0 %v422
        %978 = vmatpush1.msra.mxu0 %v421
        %979 = vmatprep.subr.mxu0 %v426
        %980 = vmatpush1.msra.mxu0 %v425
        %981 = vmatprep.subr.mxu0 %v430
        %982 = vmatpush1.msra.mxu0 %v429
        %983 = vmatprep.subr.mxu0 0.0
        %984 = vmatpush1.msra.mxu0 0.0
        %985 = vmatprep.subr.mxu0 0.0
        %986 = vmatpush1.msra.mxu0 0.0
        %987 = vmatprep.subr.mxu0 0.0
        %988 = vmatpush1.msra.mxu0 0.0
        %989 = vmatprep.subr.mxu0 0.0
        %990 = vmatpush1.msra.mxu0 0.0
        %991 = vmatprep.subr.mxu0 0.0
        %992 = vmatpush1.msra.mxu0 0.0
        %993 = vmatprep.subr.mxu0 0.0
        %994 = vmatpush1.msra.mxu0 0.0
        %995 = vmatprep.subr.mxu0 0.0
        %996 = vmatpush1.msra.mxu0 0.0
        %997 = vmatprep.subr.mxu0 0.0
        %998 = vmatpush1.msra.mxu0 0.0
        %999 = vmatprep.subr.mxu0 0.0
        %1000 = vmatpush1.msra.mxu0 0.0
        %1001 = vmatprep.subr.mxu0 0.0
        %1002 = vmatpush1.msra.mxu0 0.0
        %1003 = vmatprep.subr.mxu0 0.0
        %1004 = vmatpush1.msra.mxu0 0.0
        %1005 = vmatprep.subr.mxu0 0.0
        %1006 = vmatpush1.msra.mxu0 0.0
        %1007 = vmatprep.subr.mxu0 0.0
        %1008 = vmatpush1.msra.mxu0 0.0
        %1009 = vmatprep.subr.mxu0 0.0
        %1010 = vmatpush1.msra.mxu0 0.0
        %1011 = vmatprep.subr.mxu0 0.0
        %1012 = vmatpush1.msra.mxu0 0.0
        %1013 = vmatprep.subr.mxu0 0.0
        %1014 = vmatpush1.msra.mxu0 0.0
        %1015 = vmatprep.mubr.f32.mxu0 0.0
        %1016 = vmatmul.mubr.f32.gmra.mrb[0].mxu0 %v943
        %v1017 = vpop.f32.mrb[0].mxu0
        %v1018 = vadd.f32 0.0, %v1017
        %v1019 = vpop.f32.mrb[0].mxu0
        %v1020 = vadd.f32 0.0, %v1019
        %1021 = vdwg.mxu0
        %1022 = vmatprep.subr.mxu0 %v372
        %1023 = vmatpush1.msra.mxu0 %v371
        %1024 = vmatprep.subr.mxu0 %v376
        %1025 = vmatpush1.msra.mxu0 %v375
        %1026 = vmatprep.subr.mxu0 %v380
        %1027 = vmatpush1.msra.mxu0 %v379
        %1028 = vmatprep.subr.mxu0 %v384
        %1029 = vmatpush1.msra.mxu0 %v383
        %1030 = vmatprep.subr.mxu0 %v388
        %1031 = vmatpush1.msra.mxu0 %v387
        %1032 = vmatprep.subr.mxu0 %v392
        %1033 = vmatpush1.msra.mxu0 %v391
        %1034 = vmatprep.subr.mxu0 %v396
        %1035 = vmatpush1.msra.mxu0 %v395
        %1036 = vmatprep.subr.mxu0 %v400
        %1037 = vmatpush1.msra.mxu0 %v399
        %1038 = vmatprep.subr.mxu0 %v404
        %1039 = vmatpush1.msra.mxu0 %v403
        %1040 = vmatprep.subr.mxu0 %v408
        %1041 = vmatpush1.msra.mxu0 %v407
        %1042 = vmatprep.subr.mxu0 %v412
        %1043 = vmatpush1.msra.mxu0 %v411
        %1044 = vmatprep.subr.mxu0 %v416
        %1045 = vmatpush1.msra.mxu0 %v415
        %1046 = vmatprep.subr.mxu0 %v420
        %1047 = vmatpush1.msra.mxu0 %v419
        %1048 = vmatprep.subr.mxu0 %v424
        %1049 = vmatpush1.msra.mxu0 %v423
        %1050 = vmatprep.subr.mxu0 %v428
        %1051 = vmatpush1.msra.mxu0 %v427
        %1052 = vmatprep.subr.mxu0 %v432
        %1053 = vmatpush1.msra.mxu0 %v431
        %1054 = vmatprep.subr.mxu0 0.0
        %1055 = vmatpush1.msra.mxu0 0.0
        %1056 = vmatprep.subr.mxu0 0.0
        %1057 = vmatpush1.msra.mxu0 0.0
        %1058 = vmatprep.subr.mxu0 0.0
        %1059 = vmatpush1.msra.mxu0 0.0
        %1060 = vmatprep.subr.mxu0 0.0
        %1061 = vmatpush1.msra.mxu0 0.0
        %1062 = vmatprep.subr.mxu0 0.0
        %1063 = vmatpush1.msra.mxu0 0.0
        %1064 = vmatprep.subr.mxu0 0.0
        %1065 = vmatpush1.msra.mxu0 0.0
        %1066 = vmatprep.subr.mxu0 0.0
        %1067 = vmatpush1.msra.mxu0 0.0
        %1068 = vmatprep.subr.mxu0 0.0
        %1069 = vmatpush1.msra.mxu0 0.0
        %1070 = vmatprep.subr.mxu0 0.0
        %1071 = vmatpush1.msra.mxu0 0.0
        %1072 = vmatprep.subr.mxu0 0.0
        %1073 = vmatpush1.msra.mxu0 0.0
        %1074 = vmatprep.subr.mxu0 0.0
        %1075 = vmatpush1.msra.mxu0 0.0
        %1076 = vmatprep.subr.mxu0 0.0
        %1077 = vmatpush1.msra.mxu0 0.0
        %1078 = vmatprep.subr.mxu0 0.0
        %1079 = vmatpush1.msra.mxu0 0.0
        %1080 = vmatprep.subr.mxu0 0.0
        %1081 = vmatpush1.msra.mxu0 0.0
        %1082 = vmatprep.subr.mxu0 0.0
        %1083 = vmatpush1.msra.mxu0 0.0
        %1084 = vmatprep.subr.mxu0 0.0
        %1085 = vmatpush1.msra.mxu0 0.0
        %1086 = vmatprep.mubr.f32.mxu0 0.0
        %1087 = vmatmul.mubr.f32.gmra.mrb[0].mxu0 %v943
        %v1088 = vpop.f32.mrb[0].mxu0
        %v1089 = vadd.f32 0.0, %v1088
        %v1090 = vpop.f32.mrb[0].mxu0
        %v1091 = vadd.f32 0.0, %v1090
        %1092 = vdwg.mxu0
        %v1093 = vadd.f32 %v947, %v1018
        %v1094 = vadd.f32 %v948, %v1020
        %v1095 = vadd.f32 %v949, %v1089
        %v1096 = vadd.f32 %v950, %v1091
        %v1097 = vmul.f32 %v1094, 0.5
        %v1098 = vtanh.pop %v1097
        %v1099 = vmul.f32 %v1098, 0.5
        %v1100 = vadd.f32 %v1099, 0.5
        %v1101 = vmul.f32 %v1100, %v937
        %v1102 = vmul.f32 %v1093, 0.5
        %v1103 = vtanh.pop %v1102
        %v1104 = vmul.f32 %v1103, 0.5
        %v1105 = vadd.f32 %v1104, 0.5
        %v1106 = vtanh.pop %v1095
        %v1107 = vmul.f32 %v1105, %v1106
        %v1108 = vadd.f32 %v1101, %v1107
        %v1109 = vmul.f32 %v1096, 0.5
        %v1110 = vtanh.pop %v1109
        %v1111 = vmul.f32 %v1110, 0.5
        %v1112 = vadd.f32 %v1111, 0.5
        %v1113 = vtanh.pop %v1108
        %v1114 = vmul.f32 %v1112, %v1113
        %s1115 = scalar_lea.vmem %s351, 24 [#allocation12]
        %1116 = vst [vmem:[%s1115] sm:$0xff] %v1114
        %s1117 = scalar_lea.vmem %s295, 128 [#allocation4]
        %v1118 = vld [vmem:[%s1117] sm:$0xff]
        %v1119 = vld [vmem:[%s1117 + $0x8] sm:$0xff]
        %v1120 = vld [vmem:[%s1117 + $0x10] sm:$0xff]
        %v1121 = vld [vmem:[%s1117 + $0x18] sm:$0xff]
        %1122 = vmatprep.subr.mxu0 %v370
        %1123 = vmatpush1.msra.mxu0 %v369
        %1124 = vmatprep.subr.mxu0 %v374
        %1125 = vmatpush1.msra.mxu0 %v373
        %1126 = vmatprep.subr.mxu0 %v378
        %1127 = vmatpush1.msra.mxu0 %v377
        %1128 = vmatprep.subr.mxu0 %v382
        %1129 = vmatpush1.msra.mxu0 %v381
        %1130 = vmatprep.subr.mxu0 %v386
        %1131 = vmatpush1.msra.mxu0 %v385
        %1132 = vmatprep.subr.mxu0 %v390
        %1133 = vmatpush1.msra.mxu0 %v389
        %1134 = vmatprep.subr.mxu0 %v394
        %1135 = vmatpush1.msra.mxu0 %v393
        %1136 = vmatprep.subr.mxu0 %v398
        %1137 = vmatpush1.msra.mxu0 %v397
        %1138 = vmatprep.subr.mxu0 %v402
        %1139 = vmatpush1.msra.mxu0 %v401
        %1140 = vmatprep.subr.mxu0 %v406
        %1141 = vmatpush1.msra.mxu0 %v405
        %1142 = vmatprep.subr.mxu0 %v410
        %1143 = vmatpush1.msra.mxu0 %v409
        %1144 = vmatprep.subr.mxu0 %v414
        %1145 = vmatpush1.msra.mxu0 %v413
        %1146 = vmatprep.subr.mxu0 %v418
        %1147 = vmatpush1.msra.mxu0 %v417
        %1148 = vmatprep.subr.mxu0 %v422
        %1149 = vmatpush1.msra.mxu0 %v421
        %1150 = vmatprep.subr.mxu0 %v426
        %1151 = vmatpush1.msra.mxu0 %v425
        %1152 = vmatprep.subr.mxu0 %v430
        %1153 = vmatpush1.msra.mxu0 %v429
        %1154 = vmatprep.subr.mxu0 0.0
        %1155 = vmatpush1.msra.mxu0 0.0
        %1156 = vmatprep.subr.mxu0 0.0
        %1157 = vmatpush1.msra.mxu0 0.0
        %1158 = vmatprep.subr.mxu0 0.0
        %1159 = vmatpush1.msra.mxu0 0.0
        %1160 = vmatprep.subr.mxu0 0.0
        %1161 = vmatpush1.msra.mxu0 0.0
        %1162 = vmatprep.subr.mxu0 0.0
        %1163 = vmatpush1.msra.mxu0 0.0
        %1164 = vmatprep.subr.mxu0 0.0
        %1165 = vmatpush1.msra.mxu0 0.0
        %1166 = vmatprep.subr.mxu0 0.0
        %1167 = vmatpush1.msra.mxu0 0.0
        %1168 = vmatprep.subr.mxu0 0.0
        %1169 = vmatpush1.msra.mxu0 0.0
        %1170 = vmatprep.subr.mxu0 0.0
        %1171 = vmatpush1.msra.mxu0 0.0
        %1172 = vmatprep.subr.mxu0 0.0
        %1173 = vmatpush1.msra.mxu0 0.0
        %1174 = vmatprep.subr.mxu0 0.0
        %1175 = vmatpush1.msra.mxu0 0.0
        %1176 = vmatprep.subr.mxu0 0.0
        %1177 = vmatpush1.msra.mxu0 0.0
        %1178 = vmatprep.subr.mxu0 0.0
        %1179 = vmatpush1.msra.mxu0 0.0
        %1180 = vmatprep.subr.mxu0 0.0
        %1181 = vmatpush1.msra.mxu0 0.0
        %1182 = vmatprep.subr.mxu0 0.0
        %1183 = vmatpush1.msra.mxu0 0.0
        %1184 = vmatprep.subr.mxu0 0.0
        %1185 = vmatpush1.msra.mxu0 0.0
        %1186 = vmatprep.mubr.f32.mxu0 0.0
        %1187 = vmatmul.mubr.f32.gmra.mrb[0].mxu0 %v1114
        %v1188 = vpop.f32.mrb[0].mxu0
        %v1189 = vadd.f32 0.0, %v1188
        %v1190 = vpop.f32.mrb[0].mxu0
        %v1191 = vadd.f32 0.0, %v1190
        %1192 = vdwg.mxu0
        %1193 = vmatprep.subr.mxu0 %v372
        %1194 = vmatpush1.msra.mxu0 %v371
        %1195 = vmatprep.subr.mxu0 %v376
        %1196 = vmatpush1.msra.mxu0 %v375
        %1197 = vmatprep.subr.mxu0 %v380
        %1198 = vmatpush1.msra.mxu0 %v379
        %1199 = vmatprep.subr.mxu0 %v384
        %1200 = vmatpush1.msra.mxu0 %v383
        %1201 = vmatprep.subr.mxu0 %v388
        %1202 = vmatpush1.msra.mxu0 %v387
        %1203 = vmatprep.subr.mxu0 %v392
        %1204 = vmatpush1.msra.mxu0 %v391
        %1205 = vmatprep.subr.mxu0 %v396
        %1206 = vmatpush1.msra.mxu0 %v395
        %1207 = vmatprep.subr.mxu0 %v400
        %1208 = vmatpush1.msra.mxu0 %v399
        %1209 = vmatprep.subr.mxu0 %v404
        %1210 = vmatpush1.msra.mxu0 %v403
        %1211 = vmatprep.subr.mxu0 %v408
        %1212 = vmatpush1.msra.mxu0 %v407
        %1213 = vmatprep.subr.mxu0 %v412
        %1214 = vmatpush1.msra.mxu0 %v411
        %1215 = vmatprep.subr.mxu0 %v416
        %1216 = vmatpush1.msra.mxu0 %v415
        %1217 = vmatprep.subr.mxu0 %v420
        %1218 = vmatpush1.msra.mxu0 %v419
        %1219 = vmatprep.subr.mxu0 %v424
        %1220 = vmatpush1.msra.mxu0 %v423
        %1221 = vmatprep.subr.mxu0 %v428
        %1222 = vmatpush1.msra.mxu0 %v427
        %1223 = vmatprep.subr.mxu0 %v432
        %1224 = vmatpush1.msra.mxu0 %v431
        %1225 = vmatprep.subr.mxu0 0.0
        %1226 = vmatpush1.msra.mxu0 0.0
        %1227 = vmatprep.subr.mxu0 0.0
        %1228 = vmatpush1.msra.mxu0 0.0
        %1229 = vmatprep.subr.mxu0 0.0
        %1230 = vmatpush1.msra.mxu0 0.0
        %1231 = vmatprep.subr.mxu0 0.0
        %1232 = vmatpush1.msra.mxu0 0.0
        %1233 = vmatprep.subr.mxu0 0.0
        %1234 = vmatpush1.msra.mxu0 0.0
        %1235 = vmatprep.subr.mxu0 0.0
        %1236 = vmatpush1.msra.mxu0 0.0
        %1237 = vmatprep.subr.mxu0 0.0
        %1238 = vmatpush1.msra.mxu0 0.0
        %1239 = vmatprep.subr.mxu0 0.0
        %1240 = vmatpush1.msra.mxu0 0.0
        %1241 = vmatprep.subr.mxu0 0.0
        %1242 = vmatpush1.msra.mxu0 0.0
        %1243 = vmatprep.subr.mxu0 0.0
        %1244 = vmatpush1.msra.mxu0 0.0
        %1245 = vmatprep.subr.mxu0 0.0
        %1246 = vmatpush1.msra.mxu0 0.0
        %1247 = vmatprep.subr.mxu0 0.0
        %1248 = vmatpush1.msra.mxu0 0.0
        %1249 = vmatprep.subr.mxu0 0.0
        %1250 = vmatpush1.msra.mxu0 0.0
        %1251 = vmatprep.subr.mxu0 0.0
        %1252 = vmatpush1.msra.mxu0 0.0
        %1253 = vmatprep.subr.mxu0 0.0
        %1254 = vmatpush1.msra.mxu0 0.0
        %1255 = vmatprep.subr.mxu0 0.0
        %1256 = vmatpush1.msra.mxu0 0.0
        %1257 = vmatprep.mubr.f32.mxu0 0.0
        %1258 = vmatmul.mubr.f32.gmra.mrb[0].mxu0 %v1114
        %v1259 = vpop.f32.mrb[0].mxu0
        %v1260 = vadd.f32 0.0, %v1259
        %v1261 = vpop.f32.mrb[0].mxu0
        %v1262 = vadd.f32 0.0, %v1261
        %1263 = vdwg.mxu0
        %v1264 = vadd.f32 %v1118, %v1189
        %v1265 = vadd.f32 %v1119, %v1191
        %v1266 = vadd.f32 %v1120, %v1260
        %v1267 = vadd.f32 %v1121, %v1262
        %v1268 = vmul.f32 %v1265, 0.5
        %v1269 = vtanh.pop %v1268
        %v1270 = vmul.f32 %v1269, 0.5
        %v1271 = vadd.f32 %v1270, 0.5
        %v1272 = vmul.f32 %v1271, %v1108
        %v1273 = vmul.f32 %v1264, 0.5
        %v1274 = vtanh.pop %v1273
        %v1275 = vmul.f32 %v1274, 0.5
        %v1276 = vadd.f32 %v1275, 0.5
        %v1277 = vtanh.pop %v1266
        %v1278 = vmul.f32 %v1276, %v1277
        %v1279 = vadd.f32 %v1272, %v1278
        %v1280 = vmul.f32 %v1267, 0.5
        %v1281 = vtanh.pop %v1280
        %v1282 = vmul.f32 %v1281, 0.5
        %v1283 = vadd.f32 %v1282, 0.5
        %v1284 = vtanh.pop %v1279
        %v1285 = vmul.f32 %v1283, %v1284
        %s1286 = scalar_lea.vmem %s351, 32 [#allocation12]
        %1287 = vst [vmem:[%s1286] sm:$0xff] %v1285
        %s1288 = scalar_lea.vmem %s295, 160 [#allocation4]
        %v1289 = vld [vmem:[%s1288] sm:$0xff]
        %v1290 = vld [vmem:[%s1288 + $0x8] sm:$0xff]
        %v1291 = vld [vmem:[%s1288 + $0x10] sm:$0xff]
        %v1292 = vld [vmem:[%s1288 + $0x18] sm:$0xff]
        %1293 = vmatprep.subr.mxu0 %v370
        %1294 = vmatpush1.msra.mxu0 %v369
        %1295 = vmatprep.subr.mxu0 %v374
        %1296 = vmatpush1.msra.mxu0 %v373
        %1297 = vmatprep.subr.mxu0 %v378
        %1298 = vmatpush1.msra.mxu0 %v377
        %1299 = vmatprep.subr.mxu0 %v382
        %1300 = vmatpush1.msra.mxu0 %v381
        %1301 = vmatprep.subr.mxu0 %v386
        %1302 = vmatpush1.msra.mxu0 %v385
        %1303 = vmatprep.subr.mxu0 %v390
        %1304 = vmatpush1.msra.mxu0 %v389
        %1305 = vmatprep.subr.mxu0 %v394
        %1306 = vmatpush1.msra.mxu0 %v393
        %1307 = vmatprep.subr.mxu0 %v398
        %1308 = vmatpush1.msra.mxu0 %v397
        %1309 = vmatprep.subr.mxu0 %v402
        %1310 = vmatpush1.msra.mxu0 %v401
        %1311 = vmatprep.subr.mxu0 %v406
        %1312 = vmatpush1.msra.mxu0 %v405
        %1313 = vmatprep.subr.mxu0 %v410
        %1314 = vmatpush1.msra.mxu0 %v409
        %1315 = vmatprep.subr.mxu0 %v414
        %1316 = vmatpush1.msra.mxu0 %v413
        %1317 = vmatprep.subr.mxu0 %v418
        %1318 = vmatpush1.msra.mxu0 %v417
        %1319 = vmatprep.subr.mxu0 %v422
        %1320 = vmatpush1.msra.mxu0 %v421
        %1321 = vmatprep.subr.mxu0 %v426
        %1322 = vmatpush1.msra.mxu0 %v425
        %1323 = vmatprep.subr.mxu0 %v430
        %1324 = vmatpush1.msra.mxu0 %v429
        %1325 = vmatprep.subr.mxu0 0.0
        %1326 = vmatpush1.msra.mxu0 0.0
        %1327 = vmatprep.subr.mxu0 0.0
        %1328 = vmatpush1.msra.mxu0 0.0
        %1329 = vmatprep.subr.mxu0 0.0
        %1330 = vmatpush1.msra.mxu0 0.0
        %1331 = vmatprep.subr.mxu0 0.0
        %1332 = vmatpush1.msra.mxu0 0.0
        %1333 = vmatprep.subr.mxu0 0.0
        %1334 = vmatpush1.msra.mxu0 0.0
        %1335 = vmatprep.subr.mxu0 0.0
        %1336 = vmatpush1.msra.mxu0 0.0
        %1337 = vmatprep.subr.mxu0 0.0
        %1338 = vmatpush1.msra.mxu0 0.0
        %1339 = vmatprep.subr.mxu0 0.0
        %1340 = vmatpush1.msra.mxu0 0.0
        %1341 = vmatprep.subr.mxu0 0.0
        %1342 = vmatpush1.msra.mxu0 0.0
        %1343 = vmatprep.subr.mxu0 0.0
        %1344 = vmatpush1.msra.mxu0 0.0
        %1345 = vmatprep.subr.mxu0 0.0
        %1346 = vmatpush1.msra.mxu0 0.0
        %1347 = vmatprep.subr.mxu0 0.0
        %1348 = vmatpush1.msra.mxu0 0.0
        %1349 = vmatprep.subr.mxu0 0.0
        %1350 = vmatpush1.msra.mxu0 0.0
        %1351 = vmatprep.subr.mxu0 0.0
        %1352 = vmatpush1.msra.mxu0 0.0
        %1353 = vmatprep.subr.mxu0 0.0
        %1354 = vmatpush1.msra.mxu0 0.0
        %1355 = vmatprep.subr.mxu0 0.0
        %1356 = vmatpush1.msra.mxu0 0.0
        %1357 = vmatprep.mubr.f32.mxu0 0.0
        %1358 = vmatmul.mubr.f32.gmra.mrb[0].mxu0 %v1285
        %v1359 = vpop.f32.mrb[0].mxu0
        %v1360 = vadd.f32 0.0, %v1359
        %v1361 = vpop.f32.mrb[0].mxu0
        %v1362 = vadd.f32 0.0, %v1361
        %1363 = vdwg.mxu0
        %1364 = vmatprep.subr.mxu0 %v372
        %1365 = vmatpush1.msra.mxu0 %v371
        %1366 = vmatprep.subr.mxu0 %v376
        %1367 = vmatpush1.msra.mxu0 %v375
        %1368 = vmatprep.subr.mxu0 %v380
        %1369 = vmatpush1.msra.mxu0 %v379
        %1370 = vmatprep.subr.mxu0 %v384
        %1371 = vmatpush1.msra.mxu0 %v383
        %1372 = vmatprep.subr.mxu0 %v388
        %1373 = vmatpush1.msra.mxu0 %v387
        %1374 = vmatprep.subr.mxu0 %v392
        %1375 = vmatpush1.msra.mxu0 %v391
        %1376 = vmatprep.subr.mxu0 %v396
        %1377 = vmatpush1.msra.mxu0 %v395
        %1378 = vmatprep.subr.mxu0 %v400
        %1379 = vmatpush1.msra.mxu0 %v399
        %1380 = vmatprep.subr.mxu0 %v404
        %1381 = vmatpush1.msra.mxu0 %v403
        %1382 = vmatprep.subr.mxu0 %v408
        %1383 = vmatpush1.msra.mxu0 %v407
        %1384 = vmatprep.subr.mxu0 %v412
        %1385 = vmatpush1.msra.mxu0 %v411
        %1386 = vmatprep.subr.mxu0 %v416
        %1387 = vmatpush1.msra.mxu0 %v415
        %1388 = vmatprep.subr.mxu0 %v420
        %1389 = vmatpush1.msra.mxu0 %v419
        %1390 = vmatprep.subr.mxu0 %v424
        %1391 = vmatpush1.msra.mxu0 %v423
        %1392 = vmatprep.subr.mxu0 %v428
        %1393 = vmatpush1.msra.mxu0 %v427
        %1394 = vmatprep.subr.mxu0 %v432
        %1395 = vmatpush1.msra.mxu0 %v431
        %1396 = vmatprep.subr.mxu0 0.0
        %1397 = vmatpush1.msra.mxu0 0.0
        %1398 = vmatprep.subr.mxu0 0.0
        %1399 = vmatpush1.msra.mxu0 0.0
        %1400 = vmatprep.subr.mxu0 0.0
        %1401 = vmatpush1.msra.mxu0 0.0
        %1402 = vmatprep.subr.mxu0 0.0
        %1403 = vmatpush1.msra.mxu0 0.0
        %1404 = vmatprep.subr.mxu0 0.0
        %1405 = vmatpush1.msra.mxu0 0.0
        %1406 = vmatprep.subr.mxu0 0.0
        %1407 = vmatpush1.msra.mxu0 0.0
        %1408 = vmatprep.subr.mxu0 0.0
        %1409 = vmatpush1.msra.mxu0 0.0
        %1410 = vmatprep.subr.mxu0 0.0
        %1411 = vmatpush1.msra.mxu0 0.0
        %1412 = vmatprep.subr.mxu0 0.0
        %1413 = vmatpush1.msra.mxu0 0.0
        %1414 = vmatprep.subr.mxu0 0.0
        %1415 = vmatpush1.msra.mxu0 0.0
        %1416 = vmatprep.subr.mxu0 0.0
        %1417 = vmatpush1.msra.mxu0 0.0
        %1418 = vmatprep.subr.mxu0 0.0
        %1419 = vmatpush1.msra.mxu0 0.0
        %1420 = vmatprep.subr.mxu0 0.0
        %1421 = vmatpush1.msra.mxu0 0.0
        %1422 = vmatprep.subr.mxu0 0.0
        %1423 = vmatpush1.msra.mxu0 0.0
        %1424 = vmatprep.subr.mxu0 0.0
        %1425 = vmatpush1.msra.mxu0 0.0
        %1426 = vmatprep.subr.mxu0 0.0
        %1427 = vmatpush1.msra.mxu0 0.0
        %1428 = vmatprep.mubr.f32.mxu0 0.0
        %1429 = vmatmul.mubr.f32.gmra.mrb[0].mxu0 %v1285
        %v1430 = vpop.f32.mrb[0].mxu0
        %v1431 = vadd.f32 0.0, %v1430
        %v1432 = vpop.f32.mrb[0].mxu0
        %v1433 = vadd.f32 0.0, %v1432
        %1434 = vdwg.mxu0
        %v1435 = vadd.f32 %v1289, %v1360
        %v1436 = vadd.f32 %v1290, %v1362
        %v1437 = vadd.f32 %v1291, %v1431
        %v1438 = vadd.f32 %v1292, %v1433
        %v1439 = vmul.f32 %v1436, 0.5
        %v1440 = vtanh.pop %v1439
        %v1441 = vmul.f32 %v1440, 0.5
        %v1442 = vadd.f32 %v1441, 0.5
        %v1443 = vmul.f32 %v1442, %v1279
        %v1444 = vmul.f32 %v1435, 0.5
        %v1445 = vtanh.pop %v1444
        %v1446 = vmul.f32 %v1445, 0.5
        %v1447 = vadd.f32 %v1446, 0.5
        %v1448 = vtanh.pop %v1437
        %v1449 = vmul.f32 %v1447, %v1448
        %v1450 = vadd.f32 %v1443, %v1449
        %v1451 = vmul.f32 %v1438, 0.5
        %v1452 = vtanh.pop %v1451
        %v1453 = vmul.f32 %v1452, 0.5
        %v1454 = vadd.f32 %v1453, 0.5
        %v1455 = vtanh.pop %v1450
        %v1456 = vmul.f32 %v1454, %v1455
        %s1457 = scalar_lea.vmem %s351, 40 [#allocation12]
        %1458 = vst [vmem:[%s1457] sm:$0xff] %v1456
        %s1459 = scalar_lea.vmem %s295, 192 [#allocation4]
        %v1460 = vld [vmem:[%s1459] sm:$0xff]
        %v1461 = vld [vmem:[%s1459 + $0x8] sm:$0xff]
        %v1462 = vld [vmem:[%s1459 + $0x10] sm:$0xff]
        %v1463 = vld [vmem:[%s1459 + $0x18] sm:$0xff]
        %1464 = vmatprep.subr.mxu0 %v370
        %1465 = vmatpush1.msra.mxu0 %v369
        %1466 = vmatprep.subr.mxu0 %v374
        %1467 = vmatpush1.msra.mxu0 %v373
        %1468 = vmatprep.subr.mxu0 %v378
        %1469 = vmatpush1.msra.mxu0 %v377
        %1470 = vmatprep.subr.mxu0 %v382
        %1471 = vmatpush1.msra.mxu0 %v381
        %1472 = vmatprep.subr.mxu0 %v386
        %1473 = vmatpush1.msra.mxu0 %v385
        %1474 = vmatprep.subr.mxu0 %v390
        %1475 = vmatpush1.msra.mxu0 %v389
        %1476 = vmatprep.subr.mxu0 %v394
        %1477 = vmatpush1.msra.mxu0 %v393
        %1478 = vmatprep.subr.mxu0 %v398
        %1479 = vmatpush1.msra.mxu0 %v397
        %1480 = vmatprep.subr.mxu0 %v402
        %1481 = vmatpush1.msra.mxu0 %v401
        %1482 = vmatprep.subr.mxu0 %v406
        %1483 = vmatpush1.msra.mxu0 %v405
        %1484 = vmatprep.subr.mxu0 %v410
        %1485 = vmatpush1.msra.mxu0 %v409
        %1486 = vmatprep.subr.mxu0 %v414
        %1487 = vmatpush1.msra.mxu0 %v413
        %1488 = vmatprep.subr.mxu0 %v418
        %1489 = vmatpush1.msra.mxu0 %v417
        %1490 = vmatprep.subr.mxu0 %v422
        %1491 = vmatpush1.msra.mxu0 %v421
        %1492 = vmatprep.subr.mxu0 %v426
        %1493 = vmatpush1.msra.mxu0 %v425
        %1494 = vmatprep.subr.mxu0 %v430
        %1495 = vmatpush1.msra.mxu0 %v429
        %1496 = vmatprep.subr.mxu0 0.0
        %1497 = vmatpush1.msra.mxu0 0.0
        %1498 = vmatprep.subr.mxu0 0.0
        %1499 = vmatpush1.msra.mxu0 0.0
        %1500 = vmatprep.subr.mxu0 0.0
        %1501 = vmatpush1.msra.mxu0 0.0
        %1502 = vmatprep.subr.mxu0 0.0
        %1503 = vmatpush1.msra.mxu0 0.0
        %1504 = vmatprep.subr.mxu0 0.0
        %1505 = vmatpush1.msra.mxu0 0.0
        %1506 = vmatprep.subr.mxu0 0.0
        %1507 = vmatpush1.msra.mxu0 0.0
        %1508 = vmatprep.subr.mxu0 0.0
        %1509 = vmatpush1.msra.mxu0 0.0
        %1510 = vmatprep.subr.mxu0 0.0
        %1511 = vmatpush1.msra.mxu0 0.0
        %1512 = vmatprep.subr.mxu0 0.0
        %1513 = vmatpush1.msra.mxu0 0.0
        %1514 = vmatprep.subr.mxu0 0.0
        %1515 = vmatpush1.msra.mxu0 0.0
        %1516 = vmatprep.subr.mxu0 0.0
        %1517 = vmatpush1.msra.mxu0 0.0
        %1518 = vmatprep.subr.mxu0 0.0
        %1519 = vmatpush1.msra.mxu0 0.0
        %1520 = vmatprep.subr.mxu0 0.0
        %1521 = vmatpush1.msra.mxu0 0.0
        %1522 = vmatprep.subr.mxu0 0.0
        %1523 = vmatpush1.msra.mxu0 0.0
        %1524 = vmatprep.subr.mxu0 0.0
        %1525 = vmatpush1.msra.mxu0 0.0
        %1526 = vmatprep.subr.mxu0 0.0
        %1527 = vmatpush1.msra.mxu0 0.0
        %1528 = vmatprep.mubr.f32.mxu0 0.0
        %1529 = vmatmul.mubr.f32.gmra.mrb[0].mxu0 %v1456
        %v1530 = vpop.f32.mrb[0].mxu0
        %v1531 = vadd.f32 0.0, %v1530
        %v1532 = vpop.f32.mrb[0].mxu0
        %v1533 = vadd.f32 0.0, %v1532
        %1534 = vdwg.mxu0
        %1535 = vmatprep.subr.mxu0 %v372
        %1536 = vmatpush1.msra.mxu0 %v371
        %1537 = vmatprep.subr.mxu0 %v376
        %1538 = vmatpush1.msra.mxu0 %v375
        %1539 = vmatprep.subr.mxu0 %v380
        %1540 = vmatpush1.msra.mxu0 %v379
        %1541 = vmatprep.subr.mxu0 %v384
        %1542 = vmatpush1.msra.mxu0 %v383
        %1543 = vmatprep.subr.mxu0 %v388
        %1544 = vmatpush1.msra.mxu0 %v387
        %1545 = vmatprep.subr.mxu0 %v392
        %1546 = vmatpush1.msra.mxu0 %v391
        %1547 = vmatprep.subr.mxu0 %v396
        %1548 = vmatpush1.msra.mxu0 %v395
        %1549 = vmatprep.subr.mxu0 %v400
        %1550 = vmatpush1.msra.mxu0 %v399
        %1551 = vmatprep.subr.mxu0 %v404
        %1552 = vmatpush1.msra.mxu0 %v403
        %1553 = vmatprep.subr.mxu0 %v408
        %1554 = vmatpush1.msra.mxu0 %v407
        %1555 = vmatprep.subr.mxu0 %v412
        %1556 = vmatpush1.msra.mxu0 %v411
        %1557 = vmatprep.subr.mxu0 %v416
        %1558 = vmatpush1.msra.mxu0 %v415
        %1559 = vmatprep.subr.mxu0 %v420
        %1560 = vmatpush1.msra.mxu0 %v419
        %1561 = vmatprep.subr.mxu0 %v424
        %1562 = vmatpush1.msra.mxu0 %v423
        %1563 = vmatprep.subr.mxu0 %v428
        %1564 = vmatpush1.msra.mxu0 %v427
        %1565 = vmatprep.subr.mxu0 %v432
        %1566 = vmatpush1.msra.mxu0 %v431
        %1567 = vmatprep.subr.mxu0 0.0
        %1568 = vmatpush1.msra.mxu0 0.0
        %1569 = vmatprep.subr.mxu0 0.0
        %1570 = vmatpush1.msra.mxu0 0.0
        %1571 = vmatprep.subr.mxu0 0.0
        %1572 = vmatpush1.msra.mxu0 0.0
        %1573 = vmatprep.subr.mxu0 0.0
        %1574 = vmatpush1.msra.mxu0 0.0
        %1575 = vmatprep.subr.mxu0 0.0
        %1576 = vmatpush1.msra.mxu0 0.0
        %1577 = vmatprep.subr.mxu0 0.0
        %1578 = vmatpush1.msra.mxu0 0.0
        %1579 = vmatprep.subr.mxu0 0.0
        %1580 = vmatpush1.msra.mxu0 0.0
        %1581 = vmatprep.subr.mxu0 0.0
        %1582 = vmatpush1.msra.mxu0 0.0
        %1583 = vmatprep.subr.mxu0 0.0
        %1584 = vmatpush1.msra.mxu0 0.0
        %1585 = vmatprep.subr.mxu0 0.0
        %1586 = vmatpush1.msra.mxu0 0.0
        %1587 = vmatprep.subr.mxu0 0.0
        %1588 = vmatpush1.msra.mxu0 0.0
        %1589 = vmatprep.subr.mxu0 0.0
        %1590 = vmatpush1.msra.mxu0 0.0
        %1591 = vmatprep.subr.mxu0 0.0
        %1592 = vmatpush1.msra.mxu0 0.0
        %1593 = vmatprep.subr.mxu0 0.0
        %1594 = vmatpush1.msra.mxu0 0.0
        %1595 = vmatprep.subr.mxu0 0.0
        %1596 = vmatpush1.msra.mxu0 0.0
        %1597 = vmatprep.subr.mxu0 0.0
        %1598 = vmatpush1.msra.mxu0 0.0
        %1599 = vmatprep.mubr.f32.mxu0 0.0
        %1600 = vmatmul.mubr.f32.gmra.mrb[0].mxu0 %v1456
        %v1601 = vpop.f32.mrb[0].mxu0
        %v1602 = vadd.f32 0.0, %v1601
        %v1603 = vpop.f32.mrb[0].mxu0
        %v1604 = vadd.f32 0.0, %v1603
        %1605 = vdwg.mxu0
        %v1606 = vadd.f32 %v1460, %v1531
        %v1607 = vadd.f32 %v1461, %v1533
        %v1608 = vadd.f32 %v1462, %v1602
        %v1609 = vadd.f32 %v1463, %v1604
        %v1610 = vmul.f32 %v1607, 0.5
        %v1611 = vtanh.pop %v1610
        %v1612 = vmul.f32 %v1611, 0.5
        %v1613 = vadd.f32 %v1612, 0.5
        %v1614 = vmul.f32 %v1613, %v1450
        %v1615 = vmul.f32 %v1606, 0.5
        %v1616 = vtanh.pop %v1615
        %v1617 = vmul.f32 %v1616, 0.5
        %v1618 = vadd.f32 %v1617, 0.5
        %v1619 = vtanh.pop %v1608
        %v1620 = vmul.f32 %v1618, %v1619
        %v1621 = vadd.f32 %v1614, %v1620
        %v1622 = vmul.f32 %v1609, 0.5
        %v1623 = vtanh.pop %v1622
        %v1624 = vmul.f32 %v1623, 0.5
        %v1625 = vadd.f32 %v1624, 0.5
        %v1626 = vtanh.pop %v1621
        %v1627 = vmul.f32 %v1625, %v1626
        %s1628 = scalar_lea.vmem %s351, 48 [#allocation12]
        %1629 = vst [vmem:[%s1628] sm:$0xff] %v1627
        %s1630 = scalar_lea.vmem %s295, 224 [#allocation4]
        %v1631 = vld [vmem:[%s1630] sm:$0xff]
        %v1632 = vld [vmem:[%s1630 + $0x8] sm:$0xff]
        %v1633 = vld [vmem:[%s1630 + $0x10] sm:$0xff]
        %v1634 = vld [vmem:[%s1630 + $0x18] sm:$0xff]
        %1635 = vmatprep.subr.mxu0 %v370
        %1636 = vmatpush1.msra.mxu0 %v369
        %1637 = vmatprep.subr.mxu0 %v374
        %1638 = vmatpush1.msra.mxu0 %v373
        %1639 = vmatprep.subr.mxu0 %v378
        %1640 = vmatpush1.msra.mxu0 %v377
        %1641 = vmatprep.subr.mxu0 %v382
        %1642 = vmatpush1.msra.mxu0 %v381
        %1643 = vmatprep.subr.mxu0 %v386
        %1644 = vmatpush1.msra.mxu0 %v385
        %1645 = vmatprep.subr.mxu0 %v390
        %1646 = vmatpush1.msra.mxu0 %v389
        %1647 = vmatprep.subr.mxu0 %v394
        %1648 = vmatpush1.msra.mxu0 %v393
        %1649 = vmatprep.subr.mxu0 %v398
        %1650 = vmatpush1.msra.mxu0 %v397
        %1651 = vmatprep.subr.mxu0 %v402
        %1652 = vmatpush1.msra.mxu0 %v401
        %1653 = vmatprep.subr.mxu0 %v406
        %1654 = vmatpush1.msra.mxu0 %v405
        %1655 = vmatprep.subr.mxu0 %v410
        %1656 = vmatpush1.msra.mxu0 %v409
        %1657 = vmatprep.subr.mxu0 %v414
        %1658 = vmatpush1.msra.mxu0 %v413
        %1659 = vmatprep.subr.mxu0 %v418
        %1660 = vmatpush1.msra.mxu0 %v417
        %1661 = vmatprep.subr.mxu0 %v422
        %1662 = vmatpush1.msra.mxu0 %v421
        %1663 = vmatprep.subr.mxu0 %v426
        %1664 = vmatpush1.msra.mxu0 %v425
        %1665 = vmatprep.subr.mxu0 %v430
        %1666 = vmatpush1.msra.mxu0 %v429
        %1667 = vmatprep.subr.mxu0 0.0
        %1668 = vmatpush1.msra.mxu0 0.0
        %1669 = vmatprep.subr.mxu0 0.0
        %1670 = vmatpush1.msra.mxu0 0.0
        %1671 = vmatprep.subr.mxu0 0.0
        %1672 = vmatpush1.msra.mxu0 0.0
        %1673 = vmatprep.subr.mxu0 0.0
        %1674 = vmatpush1.msra.mxu0 0.0
        %1675 = vmatprep.subr.mxu0 0.0
        %1676 = vmatpush1.msra.mxu0 0.0
        %1677 = vmatprep.subr.mxu0 0.0
        %1678 = vmatpush1.msra.mxu0 0.0
        %1679 = vmatprep.subr.mxu0 0.0
        %1680 = vmatpush1.msra.mxu0 0.0
        %1681 = vmatprep.subr.mxu0 0.0
        %1682 = vmatpush1.msra.mxu0 0.0
        %1683 = vmatprep.subr.mxu0 0.0
        %1684 = vmatpush1.msra.mxu0 0.0
        %1685 = vmatprep.subr.mxu0 0.0
        %1686 = vmatpush1.msra.mxu0 0.0
        %1687 = vmatprep.subr.mxu0 0.0
        %1688 = vmatpush1.msra.mxu0 0.0
        %1689 = vmatprep.subr.mxu0 0.0
        %1690 = vmatpush1.msra.mxu0 0.0
        %1691 = vmatprep.subr.mxu0 0.0
        %1692 = vmatpush1.msra.mxu0 0.0
        %1693 = vmatprep.subr.mxu0 0.0
        %1694 = vmatpush1.msra.mxu0 0.0
        %1695 = vmatprep.subr.mxu0 0.0
        %1696 = vmatpush1.msra.mxu0 0.0
        %1697 = vmatprep.subr.mxu0 0.0
        %1698 = vmatpush1.msra.mxu0 0.0
        %1699 = vmatprep.mubr.f32.mxu0 0.0
        %1700 = vmatmul.mubr.f32.gmra.mrb[0].mxu0 %v1627
        %v1701 = vpop.f32.mrb[0].mxu0
        %v1702 = vadd.f32 0.0, %v1701
        %v1703 = vpop.f32.mrb[0].mxu0
        %v1704 = vadd.f32 0.0, %v1703
        %1705 = vdwg.mxu0
        %1706 = vmatprep.subr.mxu0 %v372
        %1707 = vmatpush1.msra.mxu0 %v371
        %1708 = vmatprep.subr.mxu0 %v376
        %1709 = vmatpush1.msra.mxu0 %v375
        %1710 = vmatprep.subr.mxu0 %v380
        %1711 = vmatpush1.msra.mxu0 %v379
        %1712 = vmatprep.subr.mxu0 %v384
        %1713 = vmatpush1.msra.mxu0 %v383
        %1714 = vmatprep.subr.mxu0 %v388
        %1715 = vmatpush1.msra.mxu0 %v387
        %1716 = vmatprep.subr.mxu0 %v392
        %1717 = vmatpush1.msra.mxu0 %v391
        %1718 = vmatprep.subr.mxu0 %v396
        %1719 = vmatpush1.msra.mxu0 %v395
        %1720 = vmatprep.subr.mxu0 %v400
        %1721 = vmatpush1.msra.mxu0 %v399
        %1722 = vmatprep.subr.mxu0 %v404
        %1723 = vmatpush1.msra.mxu0 %v403
        %1724 = vmatprep.subr.mxu0 %v408
        %1725 = vmatpush1.msra.mxu0 %v407
        %1726 = vmatprep.subr.mxu0 %v412
        %1727 = vmatpush1.msra.mxu0 %v411
        %1728 = vmatprep.subr.mxu0 %v416
        %1729 = vmatpush1.msra.mxu0 %v415
        %1730 = vmatprep.subr.mxu0 %v420
        %1731 = vmatpush1.msra.mxu0 %v419
        %1732 = vmatprep.subr.mxu0 %v424
        %1733 = vmatpush1.msra.mxu0 %v423
        %1734 = vmatprep.subr.mxu0 %v428
        %1735 = vmatpush1.msra.mxu0 %v427
        %1736 = vmatprep.subr.mxu0 %v432
        %1737 = vmatpush1.msra.mxu0 %v431
        %1738 = vmatprep.subr.mxu0 0.0
        %1739 = vmatpush1.msra.mxu0 0.0
        %1740 = vmatprep.subr.mxu0 0.0
        %1741 = vmatpush1.msra.mxu0 0.0
        %1742 = vmatprep.subr.mxu0 0.0
        %1743 = vmatpush1.msra.mxu0 0.0
        %1744 = vmatprep.subr.mxu0 0.0
        %1745 = vmatpush1.msra.mxu0 0.0
        %1746 = vmatprep.subr.mxu0 0.0
        %1747 = vmatpush1.msra.mxu0 0.0
        %1748 = vmatprep.subr.mxu0 0.0
        %1749 = vmatpush1.msra.mxu0 0.0
        %1750 = vmatprep.subr.mxu0 0.0
        %1751 = vmatpush1.msra.mxu0 0.0
        %1752 = vmatprep.subr.mxu0 0.0
        %1753 = vmatpush1.msra.mxu0 0.0
        %1754 = vmatprep.subr.mxu0 0.0
        %1755 = vmatpush1.msra.mxu0 0.0
        %1756 = vmatprep.subr.mxu0 0.0
        %1757 = vmatpush1.msra.mxu0 0.0
        %1758 = vmatprep.subr.mxu0 0.0
        %1759 = vmatpush1.msra.mxu0 0.0
        %1760 = vmatprep.subr.mxu0 0.0
        %1761 = vmatpush1.msra.mxu0 0.0
        %1762 = vmatprep.subr.mxu0 0.0
        %1763 = vmatpush1.msra.mxu0 0.0
        %1764 = vmatprep.subr.mxu0 0.0
        %1765 = vmatpush1.msra.mxu0 0.0
        %1766 = vmatprep.subr.mxu0 0.0
        %1767 = vmatpush1.msra.mxu0 0.0
        %1768 = vmatprep.subr.mxu0 0.0
        %1769 = vmatpush1.msra.mxu0 0.0
        %1770 = vmatprep.mubr.f32.mxu0 0.0
        %1771 = vmatmul.mubr.f32.gmra.mrb[0].mxu0 %v1627
        %v1772 = vpop.f32.mrb[0].mxu0
        %v1773 = vadd.f32 0.0, %v1772
        %v1774 = vpop.f32.mrb[0].mxu0
        %v1775 = vadd.f32 0.0, %v1774
        %1776 = vdwg.mxu0
        %v1777 = vadd.f32 %v1631, %v1702
        %v1778 = vadd.f32 %v1632, %v1704
        %v1779 = vadd.f32 %v1633, %v1773
        %v1780 = vadd.f32 %v1634, %v1775
        %v1781 = vmul.f32 %v1778, 0.5
        %v1782 = vtanh.pop %v1781
        %v1783 = vmul.f32 %v1782, 0.5
        %v1784 = vadd.f32 %v1783, 0.5
        %v1785 = vmul.f32 %v1784, %v1621
        %v1786 = vmul.f32 %v1777, 0.5
        %v1787 = vtanh.pop %v1786
        %v1788 = vmul.f32 %v1787, 0.5
        %v1789 = vadd.f32 %v1788, 0.5
        %v1790 = vtanh.pop %v1779
        %v1791 = vmul.f32 %v1789, %v1790
        %v1792 = vadd.f32 %v1785, %v1791
        %v1793 = vmul.f32 %v1780, 0.5
        %v1794 = vtanh.pop %v1793
        %v1795 = vmul.f32 %v1794, 0.5
        %v1796 = vadd.f32 %v1795, 0.5
        %v1797 = vtanh.pop %v1792
        %v1798 = vmul.f32 %v1796, %v1797
        %s1799 = scalar_lea.vmem %s351, 56 [#allocation12]
        %1800 = vst [vmem:[%s1799] sm:$0xff] %v1798
        %1801 = vst [vmem:[#allocation2] sm:$0xff] %v1798
        %1802 = vst [vmem:[#allocation3] sm:$0xff] %v1792
        %1803 = vst [vmem:[%s358] sm:$0xff] %v1792
        %s1804 = sand.u32 %s153, 1
        %s1805 = scalar_lea.sflag [#allocation6], %s1804
        %s1806 = sand.u32 %s153, 1
        %s1807 = smul.addr %s1806, 64
        %s1808 = scalar_lea.vmem [#allocation12], %s1807
        %s1809 = sand.u32 %s179, 1
        %s1810 = scalar_lea.sflag [#allocation14], %s1809
        %s1811 = sand.u32 %s179, 1
        %s1812 = smul.addr %s1811, 8
        %s1813 = scalar_lea.vmem [#allocation13], %s1812
        // Predicated region
        $region57: #{sqa_lstm_forward.2} parent=35 // pred_check
          %p1814 = pneg %p163
        $region58: #{sqa_lstm_forward.2} parent=35 // pred_check_branch
          %1816 = sbr.rel (%p1814) target = $region60
        $region59: #{sqa_lstm_forward.2} parent=35 // pred_region
          %s1817 = smul.u32 8, %s35
          %s1819 = ssub.s32 1024, 1024
          %1820 = vsyncadd %s1805, %s1819
          %s1821 = smul.addr %s1817, 2
          %s1822 = sadd.s32 %s34, %s1821
          %s1823 = smul.addr %s1822, 128
          %s1824 = scalar_lea.hbm %s4, %s1823
          %s1825 = sshll.u32 %s1808, 4
          %s1826 = int_to_ptr.vmem [resolvable:$true] %s1825
          %1831 = dma.vmem_to_hbm [thread:$0]  %s1826, 1024, %s1824, %s1805, 128, 256, 8
        $region60: #{sqa_lstm_forward.2} parent=35 // pred_fallthru
          _
        // Predicated region
        $region61: #{sqa_lstm_forward.2} parent=35 // pred_check
          %p1832 = pneg %p189
        $region62: #{sqa_lstm_forward.2} parent=35 // pred_check_branch
          %1834 = sbr.rel (%p1832) target = $region64
        $region63: #{sqa_lstm_forward.2} parent=35 // pred_region
          %s1836 = ssub.s32 128, 128
          %1837 = vsyncadd %s1810, %s1836
          %s1838 = smul.addr %s34, 128
          %s1839 = scalar_lea.hbm %s5, %s1838
          %s1841 = sshll.u32 %s1813, 4
          %s1842 = int_to_ptr.vmem [resolvable:$true] %s1841
          %1844 = dma.vmem_to_hbm [thread:$0]  %s1842, 128, %s1839, %s1810
        $region64: #{sqa_lstm_forward.2} parent=35 // pred_fallthru
          _
      $region36: #{sqa_lstm_forward.2} parent=5 // pred_fallthru
        _
      %p1845 = scmp.le.s32.totalorder 2, %s25
      // Predicated region
      $region65: #{sqa_lstm_forward.2} parent=5 // pred_check
        %p1846 = pneg %p1845
      $region66: #{sqa_lstm_forward.2} parent=5 // pred_check_branch
        %1848 = sbr.rel (%p1846) target = $region68
      $region67: #{sqa_lstm_forward.2} parent=5 // pred_region
        %s1849 = ssub.s32 %s25, 2
        // Predicated region
        $region69: #{sqa_lstm_forward.2} parent=67 // pred_check
          %p1850 = pneg %p169
        $region70: #{sqa_lstm_forward.2} parent=67 // pred_check_branch
          %1852 = sbr.rel (%p1850) target = $region72
        $region71: #{sqa_lstm_forward.2} parent=67 // pred_region
          %s1853 = sand.u32 %s154, 1
          %s1854 = scalar_lea.sflag [#allocation6], %s1853
          %s1855 = sand.u32 %s154, 1
          %s1856 = smul.addr %s1855, 64
          %s1857 = scalar_lea.vmem [#allocation12], %s1856
          %1858 = dma.done %s1854, 1024
        $region72: #{sqa_lstm_forward.2} parent=67 // pred_fallthru
          _
        // Predicated region
        $region73: #{sqa_lstm_forward.2} parent=67 // pred_check
          %p1859 = pneg %p195
        $region74: #{sqa_lstm_forward.2} parent=67 // pred_check_branch
          %1861 = sbr.rel (%p1859) target = $region76
        $region75: #{sqa_lstm_forward.2} parent=67 // pred_region
          %s1862 = sand.u32 %s180, 1
          %s1863 = scalar_lea.sflag [#allocation14], %s1862
          %s1864 = sand.u32 %s180, 1
          %s1865 = smul.addr %s1864, 8
          %s1866 = scalar_lea.vmem [#allocation13], %s1865
          %1867 = dma.done %s1863, 128
        $region76: #{sqa_lstm_forward.2} parent=67 // pred_fallthru
          _
      $region68: #{sqa_lstm_forward.2} parent=5 // pred_fallthru
        _
    $region6: #{sqa_lstm_forward.2} parent=1 // loop_footer
      %s29 = sadd.s32 1, %s25
    $region7: #{sqa_lstm_forward.2} parent=1 // loop_footer_branch
      %24 = sbr.rel target = $region3
    $region8: #{sqa_lstm_forward.2} parent=1 // loop_exit
      _
    %1868 = vsyncpa [#allocation5], 1
    %s1869 = scalar_lea.sflag [#allocation5], 1
    %1870 = vsyncpa %s1869, 1
    %1871 = vsyncpa [#allocation8], 1
    %s1872 = scalar_lea.sflag [#allocation8], 1
    %1873 = vsyncpa %s1872, 1
    %1874 = vsyncpa [#allocation11], 1
    %1875 = vsyncpa [#allocation6], 1
    %s1876 = scalar_lea.sflag [#allocation6], 1
    %1877 = vsyncpa %s1876, 1
    %1878 = vsyncpa [#allocation14], 1
    %s1879 = scalar_lea.sflag [#allocation14], 1
    %1880 = vsyncpa %s1879, 1

</llo_original>
